<compile_context>
chip_gen: v5e
topology: v5e:2x2
jax: 0.10.0
libtpu: 0.0.40
codegen_flags: <defaults>
</compile_context>

<pallas_src>
import functools

import jax
import jax.numpy as jnp
from jax.experimental import pallas as pl
from jax.experimental.pallas import tpu as pltpu


def _dwsep_kernel(x_ref, tw_ref, db_ref, g_ref, pb_ref, o_ref, *,
                  kd_sz, kh_sz, kw_sz, out_d, out_h, out_w, pitch, shifts):
    """One batch element per grid step.

    x_ref : (1, Hp, Dp, Wp*pitch)   padded input, W*C fused on lanes
    tw_ref: (KD*KH*KW, out_w*pitch) depthwise tap weights, tiled over out_w
    db_ref: (1, out_w*pitch)        depthwise bias, tiled over out_w
    g_ref : (n_shifts, out_w*pitch) shift-banded pointwise weights
    pb_ref: (1, out_h*out_w*pitch)  pointwise bias, tiled over (out_h, out_w)
    o_ref : (1, out_d, out_h*out_w*pitch)
    """
    wcp = out_w * pitch

    # ---- Depthwise 3D conv: 27 broadcast MACs over the whole depth range ----
    acc = jnp.zeros((out_h, out_d, wcp), jnp.float32)
    for kd in range(kd_sz):
        for kh in range(kh_sz):
            # kh = leading-dim offset, kd = sublane offset: plain address math.
            xs = x_ref[0, kh:kh + out_h, kd:kd + out_d, :].astype(jnp.float32)
            for kw in range(kw_sz):
                tap = (kd * kh_sz + kh) * kw_sz + kw
                # kw shift = lane-offset slice of kw*pitch (hoisted xs reused).
                acc = acc + xs[:, :, kw * pitch:kw * pitch + wcp] * tw_ref[tap]
    acc = acc + db_ref[0]

    # ---- Pointwise 1x1x1 conv, directly in the fused (w, c_out) lane layout --
    # acc lane (w*pitch + c) feeds y lane (w*pitch + co): a uniform lane shift
    # of (co - c).  y = sum over shifts s of roll(acc, s) * G[s], all on VPU/XLU,
    # exact f32 (no MXU: C_in is tiny here).
    y3 = jnp.zeros((out_h, out_d, wcp), jnp.float32)
    for i, s in enumerate(shifts):
        k = (-s) % wcp
        if k == 0:
            rolled = acc
        else:
            rolled = jnp.concatenate([acc[:, :, k:], acc[:, :, :k]], axis=-1)
        y3 = y3 + rolled * g_ref[i]

    # ---- Lane-dense store: (out_d, out_h*out_w*pitch) = full (8,128) tiles ----
    y = jnp.concatenate([y3[hh] for hh in range(out_h)], axis=-1)  # (out_d, out_h*wcp)
    y = y + pb_ref[0]
    o_ref[0] = y.astype(o_ref.dtype)


def depthwise_separable_conv3d(x_ncdhw, dw_w, dw_b, pw_w, pw_b, padding):
    """x_ncdhw: (N, C, D, H, W). dw_w: (C, 1, KD, KH, KW). pw_w: (Cout, C, 1, 1, 1)."""
    n, c_in, d, h, w = x_ncdhw.shape
    kd, kh, kw = dw_w.shape[2], dw_w.shape[3], dw_w.shape[4]
    c_out = pw_w.shape[0]
    pad = padding
    out_d = d + 2 * pad - kd + 1
    out_h = h + 2 * pad - kh + 1
    out_w = w + 2 * pad - kw + 1

    # Shared channel group pitch for the fused lane layout (channels padded with
    # zero weights up to pitch; the pad lanes never contribute).
    pitch = max(c_in, c_out)

    # ---- Wrapper-side layout glue (pure XLA, no compute) ----------------------
    x_ndhwc = jnp.transpose(x_ncdhw, (0, 2, 3, 4, 1))
    x_p = jnp.pad(x_ndhwc, ((0, 0), (pad, pad), (pad, pad), (pad, pad),
                            (0, pitch - c_in)))
    dp, hp, wp = x_p.shape[1], x_p.shape[2], x_p.shape[3]
    # (N, Hp, Dp, Wp*pitch): H leading, D on sublanes, W*C fused on lanes.
    x_t = jnp.transpose(x_p, (0, 2, 1, 3, 4)).reshape(n, hp, dp, wp * pitch)

    # Depthwise weights -> (KD*KH*KW, out_w*pitch), pad channels, tile over W.
    dw_k = jnp.transpose(dw_w[:, 0], (1, 2, 3, 0)).reshape(kd * kh * kw, c_in)
    dw_k = jnp.pad(dw_k, ((0, 0), (0, pitch - c_in)))
    tw = jnp.tile(dw_k, (1, out_w)).astype(jnp.float32)          # (KT, out_w*pitch)
    db = jnp.tile(jnp.pad(dw_b, (0, pitch - c_in)), out_w)
    db = db.reshape(1, out_w * pitch).astype(jnp.float32)

    # Pointwise weights -> shift-banded form: for shift s = co - c,
    #   G[s, w*pitch + co] = pw[c, co] if 0 <= co - s < c_in else 0.
    pw_mat = pw_w[:, :, 0, 0, 0].T.astype(jnp.float32)           # (c_in, c_out)
    shifts = tuple(range(-(c_in - 1), c_out))
    co_idx = jnp.arange(pitch)
    g_rows = []
    for s in shifts:
        c_src = co_idx - s
        valid = (c_src >= 0) & (c_src < c_in) & (co_idx < c_out)
        vals = jnp.where(valid,
                         pw_mat[jnp.clip(c_src, 0, c_in - 1),
                                jnp.clip(co_idx, 0, c_out - 1)],
                         0.0)
        g_rows.append(jnp.tile(vals, out_w))
    g_mat = jnp.stack(g_rows).astype(jnp.float32)                # (n_shifts, out_w*pitch)

    pb = jnp.tile(jnp.pad(pw_b, (0, pitch - c_out)), out_h * out_w)
    pb = pb.reshape(1, out_h * out_w * pitch).astype(jnp.float32)

    kernel = functools.partial(
        _dwsep_kernel, kd_sz=kd, kh_sz=kh, kw_sz=kw,
        out_d=out_d, out_h=out_h, out_w=out_w, pitch=pitch, shifts=shifts)

    itemsize = x_ncdhw.dtype.itemsize
    spatial_out = out_d * out_h * out_w
    flops = (2 * n * spatial_out * c_in * (kd * kh * kw)
             + 2 * n * spatial_out * c_in * c_out)
    bytes_accessed = int(
        x_t.size * itemsize                                       # input, read once
        + n * out_d * out_h * out_w * pitch * itemsize            # output
        + (tw.size + db.size + g_mat.size + pb.size) * 4)         # params (once)

    out = pl.pallas_call(
        kernel,
        out_shape=jax.ShapeDtypeStruct((n, out_d, out_h * out_w * pitch),
                                       x_ncdhw.dtype),
        grid=(n,),
        in_specs=[
            pl.BlockSpec((1, hp, dp, wp * pitch), lambda ni: (ni, 0, 0, 0)),
            pl.BlockSpec(tw.shape, lambda ni: (0, 0)),
            pl.BlockSpec(db.shape, lambda ni: (0, 0)),
            pl.BlockSpec(g_mat.shape, lambda ni: (0, 0)),
            pl.BlockSpec(pb.shape, lambda ni: (0, 0)),
        ],
        out_specs=pl.BlockSpec((1, out_d, out_h * out_w * pitch),
                               lambda ni: (ni, 0, 0)),
        compiler_params=pltpu.CompilerParams(
            dimension_semantics=("parallel",)),
        cost_estimate=pl.CostEstimate(flops=int(flops), transcendentals=0,
                                      bytes_accessed=bytes_accessed),
    )(x_t, tw, db, g_mat, pb)

    # Un-fuse the lane-dense slab, drop pad channels, back to PyTorch NCDHW.
    out = out.reshape(n, out_d, out_h, out_w, pitch)[..., :c_out]
    return jnp.transpose(out, (0, 4, 1, 2, 3))


if __name__ == "__main__":
    key = jax.random.PRNGKey(0)
    k1, k2, k3, k4, k5 = jax.random.split(key, 5)

    # Small shapes consistent with the module: nin=4, nout=8, kernel=3, padding=1.
    N, NIN, NOUT, D, H, W = 2, 4, 8, 8, 8, 8
    K, PAD = 3, 1

    x = jax.random.normal(k1, (N, NIN, D, H, W), jnp.float32)
    dw_w = jax.random.normal(k2, (NIN, 1, K, K, K), jnp.float32) * 0.1   # groups=nin, kpl=1
    dw_b = jax.random.normal(k3, (NIN,), jnp.float32) * 0.1
    pw_w = jax.random.normal(k4, (NOUT, NIN, 1, 1, 1), jnp.float32) * 0.1
    pw_b = jax.random.normal(k5, (NOUT,), jnp.float32) * 0.1

    out = depthwise_separable_conv3d(x, dw_w, dw_b, pw_w, pw_b, PAD)
    out = jax.block_until_ready(out)

    # Pure-JAX reference (matches PyTorch Conv3d semantics).
    ref = jax.lax.conv_general_dilated(
        x, dw_w, window_strides=(1, 1, 1), padding=((PAD, PAD),) * 3,
        feature_group_count=NIN,
        dimension_numbers=("NCDHW", "OIDHW", "NCDHW"))
    ref = ref + dw_b[None, :, None, None, None]
    ref = jax.lax.conv_general_dilated(
        ref, pw_w, window_strides=(1, 1, 1), padding="VALID",
        dimension_numbers=("NCDHW", "OIDHW", "NCDHW"))
    ref = ref + pw_b[None, :, None, None, None]

    assert out.shape == ref.shape, (out.shape, ref.shape)
    max_err = float(jnp.max(jnp.abs(out - ref)))
    assert jnp.allclose(out, ref, rtol=1e-4, atol=1e-4), max_err
    print("KERNEL_OK")
</pallas_src>

<mosaic_0001>
module attributes {stable_mosaic.version = 11 : i64} {
  func.func @_dwsep_kernel(%arg0: i32, %arg1: memref<1x10x10x80xf32, #tpu.memory_space<vmem>>, %arg2: memref<27x64xf32, #tpu.memory_space<vmem>>, %arg3: memref<1x64xf32, #tpu.memory_space<vmem>>, %arg4: memref<11x64xf32, #tpu.memory_space<vmem>>, %arg5: memref<1x512xf32, #tpu.memory_space<vmem>>, %arg6: memref<1x8x512xf32, #tpu.memory_space<vmem>>) attributes {dimension_semantics = [#tpu.dimension_semantics<parallel>], iteration_bounds = array<i64: 2>, scalar_prefetch = 0 : i64, scratch_operands = 0 : i64, tpu.core_type = #tpu.core_type<tc>, window_params = [{transform_indices = @transform_0, window_bounds = array<i64: 1, 10, 10, 80>}, {pipeline_mode = #tpu.pipeline_mode<synchronous>, transform_indices = @transform_1, window_bounds = array<i64: 27, 64>}, {pipeline_mode = #tpu.pipeline_mode<synchronous>, transform_indices = @transform_2, window_bounds = array<i64: 1, 64>}, {pipeline_mode = #tpu.pipeline_mode<synchronous>, transform_indices = @transform_3, window_bounds = array<i64: 11, 64>}, {pipeline_mode = #tpu.pipeline_mode<synchronous>, transform_indices = @transform_4, window_bounds = array<i64: 1, 512>}, {transform_indices = @transform_5, window_bounds = array<i64: 1, 8, 512>}]} {
    %cst = arith.constant 0.000000e+00 : f32
    %0 = vector.broadcast %cst : f32 to vector<8x8x64xf32>
    %c0 = arith.constant 0 : index
    %c0_0 = arith.constant 0 : index
    %c0_1 = arith.constant 0 : index
    %c0_2 = arith.constant 0 : index
    %1 = vector.load %arg1[%c0, %c0_0, %c0_1, %c0_2] : memref<1x10x10x80xf32, #tpu.memory_space<vmem>>, vector<1x8x8x80xf32>
    %2 = vector.shape_cast %1 : vector<1x8x8x80xf32> to vector<8x8x80xf32>
    %3 = vector.extract_strided_slice %2 {offsets = [0, 0, 0], sizes = [8, 8, 64], strides = [1, 1, 1]} : vector<8x8x80xf32> to vector<8x8x64xf32>
    %c0_3 = arith.constant 0 : index
    %c0_4 = arith.constant 0 : index
    %4 = vector.load %arg2[%c0_3, %c0_4] : memref<27x64xf32, #tpu.memory_space<vmem>>, vector<1x64xf32>
    %5 = vector.shape_cast %4 : vector<1x64xf32> to vector<64xf32>
    %6 = vector.shape_cast %5 : vector<64xf32> to vector<1x1x64xf32>
    %7 = vector.broadcast %6 : vector<1x1x64xf32> to vector<8x8x64xf32>
    %8 = arith.mulf %3, %7 : vector<8x8x64xf32>
    %9 = arith.addf %0, %8 : vector<8x8x64xf32>
    %10 = vector.extract_strided_slice %2 {offsets = [0, 0, 8], sizes = [8, 8, 64], strides = [1, 1, 1]} : vector<8x8x80xf32> to vector<8x8x64xf32>
    %c1 = arith.constant 1 : index
    %c0_5 = arith.constant 0 : index
    %11 = vector.load %arg2[%c1, %c0_5] : memref<27x64xf32, #tpu.memory_space<vmem>>, vector<1x64xf32>
    %12 = vector.shape_cast %11 : vector<1x64xf32> to vector<64xf32>
    %13 = vector.shape_cast %12 : vector<64xf32> to vector<1x1x64xf32>
    %14 = vector.broadcast %13 : vector<1x1x64xf32> to vector<8x8x64xf32>
    %15 = arith.mulf %10, %14 : vector<8x8x64xf32>
    %16 = arith.addf %9, %15 : vector<8x8x64xf32>
    %17 = vector.extract_strided_slice %2 {offsets = [0, 0, 16], sizes = [8, 8, 64], strides = [1, 1, 1]} : vector<8x8x80xf32> to vector<8x8x64xf32>
    %c2 = arith.constant 2 : index
    %c0_6 = arith.constant 0 : index
    %18 = vector.load %arg2[%c2, %c0_6] : memref<27x64xf32, #tpu.memory_space<vmem>>, vector<1x64xf32>
    %19 = vector.shape_cast %18 : vector<1x64xf32> to vector<64xf32>
    %20 = vector.shape_cast %19 : vector<64xf32> to vector<1x1x64xf32>
    %21 = vector.broadcast %20 : vector<1x1x64xf32> to vector<8x8x64xf32>
    %22 = arith.mulf %17, %21 : vector<8x8x64xf32>
    %23 = arith.addf %16, %22 : vector<8x8x64xf32>
    %c0_7 = arith.constant 0 : index
    %c1_8 = arith.constant 1 : index
    %c0_9 = arith.constant 0 : index
    %c0_10 = arith.constant 0 : index
    %24 = vector.load %arg1[%c0_7, %c1_8, %c0_9, %c0_10] : memref<1x10x10x80xf32, #tpu.memory_space<vmem>>, vector<1x8x8x80xf32>
    %25 = vector.shape_cast %24 : vector<1x8x8x80xf32> to vector<8x8x80xf32>
    %26 = vector.extract_strided_slice %25 {offsets = [0, 0, 0], sizes = [8, 8, 64], strides = [1, 1, 1]} : vector<8x8x80xf32> to vector<8x8x64xf32>
    %c3 = arith.constant 3 : index
    %c0_11 = arith.constant 0 : index
    %27 = vector.load %arg2[%c3, %c0_11] : memref<27x64xf32, #tpu.memory_space<vmem>>, vector<1x64xf32>
    %28 = vector.shape_cast %27 : vector<1x64xf32> to vector<64xf32>
    %29 = vector.shape_cast %28 : vector<64xf32> to vector<1x1x64xf32>
    %30 = vector.broadcast %29 : vector<1x1x64xf32> to vector<8x8x64xf32>
    %31 = arith.mulf %26, %30 : vector<8x8x64xf32>
    %32 = arith.addf %23, %31 : vector<8x8x64xf32>
    %33 = vector.extract_strided_slice %25 {offsets = [0, 0, 8], sizes = [8, 8, 64], strides = [1, 1, 1]} : vector<8x8x80xf32> to vector<8x8x64xf32>
    %c4 = arith.constant 4 : index
    %c0_12 = arith.constant 0 : index
    %34 = vector.load %arg2[%c4, %c0_12] : memref<27x64xf32, #tpu.memory_space<vmem>>, vector<1x64xf32>
    %35 = vector.shape_cast %34 : vector<1x64xf32> to vector<64xf32>
    %36 = vector.shape_cast %35 : vector<64xf32> to vector<1x1x64xf32>
    %37 = vector.broadcast %36 : vector<1x1x64xf32> to vector<8x8x64xf32>
    %38 = arith.mulf %33, %37 : vector<8x8x64xf32>
    %39 = arith.addf %32, %38 : vector<8x8x64xf32>
    %40 = vector.extract_strided_slice %25 {offsets = [0, 0, 16], sizes = [8, 8, 64], strides = [1, 1, 1]} : vector<8x8x80xf32> to vector<8x8x64xf32>
    %c5 = arith.constant 5 : index
    %c0_13 = arith.constant 0 : index
    %41 = vector.load %arg2[%c5, %c0_13] : memref<27x64xf32, #tpu.memory_space<vmem>>, vector<1x64xf32>
    %42 = vector.shape_cast %41 : vector<1x64xf32> to vector<64xf32>
    %43 = vector.shape_cast %42 : vector<64xf32> to vector<1x1x64xf32>
    %44 = vector.broadcast %43 : vector<1x1x64xf32> to vector<8x8x64xf32>
    %45 = arith.mulf %40, %44 : vector<8x8x64xf32>
    %46 = arith.addf %39, %45 : vector<8x8x64xf32>
    %c0_14 = arith.constant 0 : index
    %c2_15 = arith.constant 2 : index
    %c0_16 = arith.constant 0 : index
    %c0_17 = arith.constant 0 : index
    %47 = vector.load %arg1[%c0_14, %c2_15, %c0_16, %c0_17] : memref<1x10x10x80xf32, #tpu.memory_space<vmem>>, vector<1x8x8x80xf32>
    %48 = vector.shape_cast %47 : vector<1x8x8x80xf32> to vector<8x8x80xf32>
    %49 = vector.extract_strided_slice %48 {offsets = [0, 0, 0], sizes = [8, 8, 64], strides = [1, 1, 1]} : vector<8x8x80xf32> to vector<8x8x64xf32>
    %c6 = arith.constant 6 : index
    %c0_18 = arith.constant 0 : index
    %50 = vector.load %arg2[%c6, %c0_18] : memref<27x64xf32, #tpu.memory_space<vmem>>, vector<1x64xf32>
    %51 = vector.shape_cast %50 : vector<1x64xf32> to vector<64xf32>
    %52 = vector.shape_cast %51 : vector<64xf32> to vector<1x1x64xf32>
    %53 = vector.broadcast %52 : vector<1x1x64xf32> to vector<8x8x64xf32>
    %54 = arith.mulf %49, %53 : vector<8x8x64xf32>
    %55 = arith.addf %46, %54 : vector<8x8x64xf32>
    %56 = vector.extract_strided_slice %48 {offsets = [0, 0, 8], sizes = [8, 8, 64], strides = [1, 1, 1]} : vector<8x8x80xf32> to vector<8x8x64xf32>
    %c7 = arith.constant 7 : index
    %c0_19 = arith.constant 0 : index
    %57 = vector.load %arg2[%c7, %c0_19] : memref<27x64xf32, #tpu.memory_space<vmem>>, vector<1x64xf32>
    %58 = vector.shape_cast %57 : vector<1x64xf32> to vector<64xf32>
    %59 = vector.shape_cast %58 : vector<64xf32> to vector<1x1x64xf32>
    %60 = vector.broadcast %59 : vector<1x1x64xf32> to vector<8x8x64xf32>
    %61 = arith.mulf %56, %60 : vector<8x8x64xf32>
    %62 = arith.addf %55, %61 : vector<8x8x64xf32>
    %63 = vector.extract_strided_slice %48 {offsets = [0, 0, 16], sizes = [8, 8, 64], strides = [1, 1, 1]} : vector<8x8x80xf32> to vector<8x8x64xf32>
    %c8 = arith.constant 8 : index
    %c0_20 = arith.constant 0 : index
    %64 = vector.load %arg2[%c8, %c0_20] : memref<27x64xf32, #tpu.memory_space<vmem>>, vector<1x64xf32>
    %65 = vector.shape_cast %64 : vector<1x64xf32> to vector<64xf32>
    %66 = vector.shape_cast %65 : vector<64xf32> to vector<1x1x64xf32>
    %67 = vector.broadcast %66 : vector<1x1x64xf32> to vector<8x8x64xf32>
    %68 = arith.mulf %63, %67 : vector<8x8x64xf32>
    %69 = arith.addf %62, %68 : vector<8x8x64xf32>
    %c0_21 = arith.constant 0 : index
    %c0_22 = arith.constant 0 : index
    %c1_23 = arith.constant 1 : index
    %c0_24 = arith.constant 0 : index
    %70 = vector.load %arg1[%c0_21, %c0_22, %c1_23, %c0_24] : memref<1x10x10x80xf32, #tpu.memory_space<vmem>>, vector<1x8x8x80xf32>
    %71 = vector.shape_cast %70 : vector<1x8x8x80xf32> to vector<8x8x80xf32>
    %72 = vector.extract_strided_slice %71 {offsets = [0, 0, 0], sizes = [8, 8, 64], strides = [1, 1, 1]} : vector<8x8x80xf32> to vector<8x8x64xf32>
    %c9 = arith.constant 9 : index
    %c0_25 = arith.constant 0 : index
    %73 = vector.load %arg2[%c9, %c0_25] : memref<27x64xf32, #tpu.memory_space<vmem>>, vector<1x64xf32>
    %74 = vector.shape_cast %73 : vector<1x64xf32> to vector<64xf32>
    %75 = vector.shape_cast %74 : vector<64xf32> to vector<1x1x64xf32>
    %76 = vector.broadcast %75 : vector<1x1x64xf32> to vector<8x8x64xf32>
    %77 = arith.mulf %72, %76 : vector<8x8x64xf32>
    %78 = arith.addf %69, %77 : vector<8x8x64xf32>
    %79 = vector.extract_strided_slice %71 {offsets = [0, 0, 8], sizes = [8, 8, 64], strides = [1, 1, 1]} : vector<8x8x80xf32> to vector<8x8x64xf32>
    %c10 = arith.constant 10 : index
    %c0_26 = arith.constant 0 : index
    %80 = vector.load %arg2[%c10, %c0_26] : memref<27x64xf32, #tpu.memory_space<vmem>>, vector<1x64xf32>
    %81 = vector.shape_cast %80 : vector<1x64xf32> to vector<64xf32>
    %82 = vector.shape_cast %81 : vector<64xf32> to vector<1x1x64xf32>
    %83 = vector.broadcast %82 : vector<1x1x64xf32> to vector<8x8x64xf32>
    %84 = arith.mulf %79, %83 : vector<8x8x64xf32>
    %85 = arith.addf %78, %84 : vector<8x8x64xf32>
    %86 = vector.extract_strided_slice %71 {offsets = [0, 0, 16], sizes = [8, 8, 64], strides = [1, 1, 1]} : vector<8x8x80xf32> to vector<8x8x64xf32>
    %c11 = arith.constant 11 : index
    %c0_27 = arith.constant 0 : index
    %87 = vector.load %arg2[%c11, %c0_27] : memref<27x64xf32, #tpu.memory_space<vmem>>, vector<1x64xf32>
    %88 = vector.shape_cast %87 : vector<1x64xf32> to vector<64xf32>
    %89 = vector.shape_cast %88 : vector<64xf32> to vector<1x1x64xf32>
    %90 = vector.broadcast %89 : vector<1x1x64xf32> to vector<8x8x64xf32>
    %91 = arith.mulf %86, %90 : vector<8x8x64xf32>
    %92 = arith.addf %85, %91 : vector<8x8x64xf32>
    %c0_28 = arith.constant 0 : index
    %c1_29 = arith.constant 1 : index
    %c1_30 = arith.constant 1 : index
    %c0_31 = arith.constant 0 : index
    %93 = vector.load %arg1[%c0_28, %c1_29, %c1_30, %c0_31] : memref<1x10x10x80xf32, #tpu.memory_space<vmem>>, vector<1x8x8x80xf32>
    %94 = vector.shape_cast %93 : vector<1x8x8x80xf32> to vector<8x8x80xf32>
    %95 = vector.extract_strided_slice %94 {offsets = [0, 0, 0], sizes = [8, 8, 64], strides = [1, 1, 1]} : vector<8x8x80xf32> to vector<8x8x64xf32>
    %c12 = arith.constant 12 : index
    %c0_32 = arith.constant 0 : index
    %96 = vector.load %arg2[%c12, %c0_32] : memref<27x64xf32, #tpu.memory_space<vmem>>, vector<1x64xf32>
    %97 = vector.shape_cast %96 : vector<1x64xf32> to vector<64xf32>
    %98 = vector.shape_cast %97 : vector<64xf32> to vector<1x1x64xf32>
    %99 = vector.broadcast %98 : vector<1x1x64xf32> to vector<8x8x64xf32>
    %100 = arith.mulf %95, %99 : vector<8x8x64xf32>
    %101 = arith.addf %92, %100 : vector<8x8x64xf32>
    %102 = vector.extract_strided_slice %94 {offsets = [0, 0, 8], sizes = [8, 8, 64], strides = [1, 1, 1]} : vector<8x8x80xf32> to vector<8x8x64xf32>
    %c13 = arith.constant 13 : index
    %c0_33 = arith.constant 0 : index
    %103 = vector.load %arg2[%c13, %c0_33] : memref<27x64xf32, #tpu.memory_space<vmem>>, vector<1x64xf32>
    %104 = vector.shape_cast %103 : vector<1x64xf32> to vector<64xf32>
    %105 = vector.shape_cast %104 : vector<64xf32> to vector<1x1x64xf32>
    %106 = vector.broadcast %105 : vector<1x1x64xf32> to vector<8x8x64xf32>
    %107 = arith.mulf %102, %106 : vector<8x8x64xf32>
    %108 = arith.addf %101, %107 : vector<8x8x64xf32>
    %109 = vector.extract_strided_slice %94 {offsets = [0, 0, 16], sizes = [8, 8, 64], strides = [1, 1, 1]} : vector<8x8x80xf32> to vector<8x8x64xf32>
    %c14 = arith.constant 14 : index
    %c0_34 = arith.constant 0 : index
    %110 = vector.load %arg2[%c14, %c0_34] : memref<27x64xf32, #tpu.memory_space<vmem>>, vector<1x64xf32>
    %111 = vector.shape_cast %110 : vector<1x64xf32> to vector<64xf32>
    %112 = vector.shape_cast %111 : vector<64xf32> to vector<1x1x64xf32>
    %113 = vector.broadcast %112 : vector<1x1x64xf32> to vector<8x8x64xf32>
    %114 = arith.mulf %109, %113 : vector<8x8x64xf32>
    %115 = arith.addf %108, %114 : vector<8x8x64xf32>
    %c0_35 = arith.constant 0 : index
    %c2_36 = arith.constant 2 : index
    %c1_37 = arith.constant 1 : index
    %c0_38 = arith.constant 0 : index
    %116 = vector.load %arg1[%c0_35, %c2_36, %c1_37, %c0_38] : memref<1x10x10x80xf32, #tpu.memory_space<vmem>>, vector<1x8x8x80xf32>
    %117 = vector.shape_cast %116 : vector<1x8x8x80xf32> to vector<8x8x80xf32>
    %118 = vector.extract_strided_slice %117 {offsets = [0, 0, 0], sizes = [8, 8, 64], strides = [1, 1, 1]} : vector<8x8x80xf32> to vector<8x8x64xf32>
    %c15 = arith.constant 15 : index
    %c0_39 = arith.constant 0 : index
    %119 = vector.load %arg2[%c15, %c0_39] : memref<27x64xf32, #tpu.memory_space<vmem>>, vector<1x64xf32>
    %120 = vector.shape_cast %119 : vector<1x64xf32> to vector<64xf32>
    %121 = vector.shape_cast %120 : vector<64xf32> to vector<1x1x64xf32>
    %122 = vector.broadcast %121 : vector<1x1x64xf32> to vector<8x8x64xf32>
    %123 = arith.mulf %118, %122 : vector<8x8x64xf32>
    %124 = arith.addf %115, %123 : vector<8x8x64xf32>
    %125 = vector.extract_strided_slice %117 {offsets = [0, 0, 8], sizes = [8, 8, 64], strides = [1, 1, 1]} : vector<8x8x80xf32> to vector<8x8x64xf32>
    %c16 = arith.constant 16 : index
    %c0_40 = arith.constant 0 : index
    %126 = vector.load %arg2[%c16, %c0_40] : memref<27x64xf32, #tpu.memory_space<vmem>>, vector<1x64xf32>
    %127 = vector.shape_cast %126 : vector<1x64xf32> to vector<64xf32>
    %128 = vector.shape_cast %127 : vector<64xf32> to vector<1x1x64xf32>
    %129 = vector.broadcast %128 : vector<1x1x64xf32> to vector<8x8x64xf32>
    %130 = arith.mulf %125, %129 : vector<8x8x64xf32>
    %131 = arith.addf %124, %130 : vector<8x8x64xf32>
    %132 = vector.extract_strided_slice %117 {offsets = [0, 0, 16], sizes = [8, 8, 64], strides = [1, 1, 1]} : vector<8x8x80xf32> to vector<8x8x64xf32>
    %c17 = arith.constant 17 : index
    %c0_41 = arith.constant 0 : index
    %133 = vector.load %arg2[%c17, %c0_41] : memref<27x64xf32, #tpu.memory_space<vmem>>, vector<1x64xf32>
    %134 = vector.shape_cast %133 : vector<1x64xf32> to vector<64xf32>
    %135 = vector.shape_cast %134 : vector<64xf32> to vector<1x1x64xf32>
    %136 = vector.broadcast %135 : vector<1x1x64xf32> to vector<8x8x64xf32>
    %137 = arith.mulf %132, %136 : vector<8x8x64xf32>
    %138 = arith.addf %131, %137 : vector<8x8x64xf32>
    %c0_42 = arith.constant 0 : index
    %c0_43 = arith.constant 0 : index
    %c2_44 = arith.constant 2 : index
    %c0_45 = arith.constant 0 : index
    %139 = vector.load %arg1[%c0_42, %c0_43, %c2_44, %c0_45] : memref<1x10x10x80xf32, #tpu.memory_space<vmem>>, vector<1x8x8x80xf32>
    %140 = vector.shape_cast %139 : vector<1x8x8x80xf32> to vector<8x8x80xf32>
    %141 = vector.extract_strided_slice %140 {offsets = [0, 0, 0], sizes = [8, 8, 64], strides = [1, 1, 1]} : vector<8x8x80xf32> to vector<8x8x64xf32>
    %c18 = arith.constant 18 : index
    %c0_46 = arith.constant 0 : index
    %142 = vector.load %arg2[%c18, %c0_46] : memref<27x64xf32, #tpu.memory_space<vmem>>, vector<1x64xf32>
    %143 = vector.shape_cast %142 : vector<1x64xf32> to vector<64xf32>
    %144 = vector.shape_cast %143 : vector<64xf32> to vector<1x1x64xf32>
    %145 = vector.broadcast %144 : vector<1x1x64xf32> to vector<8x8x64xf32>
    %146 = arith.mulf %141, %145 : vector<8x8x64xf32>
    %147 = arith.addf %138, %146 : vector<8x8x64xf32>
    %148 = vector.extract_strided_slice %140 {offsets = [0, 0, 8], sizes = [8, 8, 64], strides = [1, 1, 1]} : vector<8x8x80xf32> to vector<8x8x64xf32>
    %c19 = arith.constant 19 : index
    %c0_47 = arith.constant 0 : index
    %149 = vector.load %arg2[%c19, %c0_47] : memref<27x64xf32, #tpu.memory_space<vmem>>, vector<1x64xf32>
    %150 = vector.shape_cast %149 : vector<1x64xf32> to vector<64xf32>
    %151 = vector.shape_cast %150 : vector<64xf32> to vector<1x1x64xf32>
    %152 = vector.broadcast %151 : vector<1x1x64xf32> to vector<8x8x64xf32>
    %153 = arith.mulf %148, %152 : vector<8x8x64xf32>
    %154 = arith.addf %147, %153 : vector<8x8x64xf32>
    %155 = vector.extract_strided_slice %140 {offsets = [0, 0, 16], sizes = [8, 8, 64], strides = [1, 1, 1]} : vector<8x8x80xf32> to vector<8x8x64xf32>
    %c20 = arith.constant 20 : index
    %c0_48 = arith.constant 0 : index
    %156 = vector.load %arg2[%c20, %c0_48] : memref<27x64xf32, #tpu.memory_space<vmem>>, vector<1x64xf32>
    %157 = vector.shape_cast %156 : vector<1x64xf32> to vector<64xf32>
    %158 = vector.shape_cast %157 : vector<64xf32> to vector<1x1x64xf32>
    %159 = vector.broadcast %158 : vector<1x1x64xf32> to vector<8x8x64xf32>
    %160 = arith.mulf %155, %159 : vector<8x8x64xf32>
    %161 = arith.addf %154, %160 : vector<8x8x64xf32>
    %c0_49 = arith.constant 0 : index
    %c1_50 = arith.constant 1 : index
    %c2_51 = arith.constant 2 : index
    %c0_52 = arith.constant 0 : index
    %162 = vector.load %arg1[%c0_49, %c1_50, %c2_51, %c0_52] : memref<1x10x10x80xf32, #tpu.memory_space<vmem>>, vector<1x8x8x80xf32>
    %163 = vector.shape_cast %162 : vector<1x8x8x80xf32> to vector<8x8x80xf32>
    %164 = vector.extract_strided_slice %163 {offsets = [0, 0, 0], sizes = [8, 8, 64], strides = [1, 1, 1]} : vector<8x8x80xf32> to vector<8x8x64xf32>
    %c21 = arith.constant 21 : index
    %c0_53 = arith.constant 0 : index
    %165 = vector.load %arg2[%c21, %c0_53] : memref<27x64xf32, #tpu.memory_space<vmem>>, vector<1x64xf32>
    %166 = vector.shape_cast %165 : vector<1x64xf32> to vector<64xf32>
    %167 = vector.shape_cast %166 : vector<64xf32> to vector<1x1x64xf32>
    %168 = vector.broadcast %167 : vector<1x1x64xf32> to vector<8x8x64xf32>
    %169 = arith.mulf %164, %168 : vector<8x8x64xf32>
    %170 = arith.addf %161, %169 : vector<8x8x64xf32>
    %171 = vector.extract_strided_slice %163 {offsets = [0, 0, 8], sizes = [8, 8, 64], strides = [1, 1, 1]} : vector<8x8x80xf32> to vector<8x8x64xf32>
    %c22 = arith.constant 22 : index
    %c0_54 = arith.constant 0 : index
    %172 = vector.load %arg2[%c22, %c0_54] : memref<27x64xf32, #tpu.memory_space<vmem>>, vector<1x64xf32>
    %173 = vector.shape_cast %172 : vector<1x64xf32> to vector<64xf32>
    %174 = vector.shape_cast %173 : vector<64xf32> to vector<1x1x64xf32>
    %175 = vector.broadcast %174 : vector<1x1x64xf32> to vector<8x8x64xf32>
    %176 = arith.mulf %171, %175 : vector<8x8x64xf32>
    %177 = arith.addf %170, %176 : vector<8x8x64xf32>
    %178 = vector.extract_strided_slice %163 {offsets = [0, 0, 16], sizes = [8, 8, 64], strides = [1, 1, 1]} : vector<8x8x80xf32> to vector<8x8x64xf32>
    %c23 = arith.constant 23 : index
    %c0_55 = arith.constant 0 : index
    %179 = vector.load %arg2[%c23, %c0_55] : memref<27x64xf32, #tpu.memory_space<vmem>>, vector<1x64xf32>
    %180 = vector.shape_cast %179 : vector<1x64xf32> to vector<64xf32>
    %181 = vector.shape_cast %180 : vector<64xf32> to vector<1x1x64xf32>
    %182 = vector.broadcast %181 : vector<1x1x64xf32> to vector<8x8x64xf32>
    %183 = arith.mulf %178, %182 : vector<8x8x64xf32>
    %184 = arith.addf %177, %183 : vector<8x8x64xf32>
    %c0_56 = arith.constant 0 : index
    %c2_57 = arith.constant 2 : index
    %c2_58 = arith.constant 2 : index
    %c0_59 = arith.constant 0 : index
    %185 = vector.load %arg1[%c0_56, %c2_57, %c2_58, %c0_59] : memref<1x10x10x80xf32, #tpu.memory_space<vmem>>, vector<1x8x8x80xf32>
    %186 = vector.shape_cast %185 : vector<1x8x8x80xf32> to vector<8x8x80xf32>
    %187 = vector.extract_strided_slice %186 {offsets = [0, 0, 0], sizes = [8, 8, 64], strides = [1, 1, 1]} : vector<8x8x80xf32> to vector<8x8x64xf32>
    %c24 = arith.constant 24 : index
    %c0_60 = arith.constant 0 : index
    %188 = vector.load %arg2[%c24, %c0_60] : memref<27x64xf32, #tpu.memory_space<vmem>>, vector<1x64xf32>
    %189 = vector.shape_cast %188 : vector<1x64xf32> to vector<64xf32>
    %190 = vector.shape_cast %189 : vector<64xf32> to vector<1x1x64xf32>
    %191 = vector.broadcast %190 : vector<1x1x64xf32> to vector<8x8x64xf32>
    %192 = arith.mulf %187, %191 : vector<8x8x64xf32>
    %193 = arith.addf %184, %192 : vector<8x8x64xf32>
    %194 = vector.extract_strided_slice %186 {offsets = [0, 0, 8], sizes = [8, 8, 64], strides = [1, 1, 1]} : vector<8x8x80xf32> to vector<8x8x64xf32>
    %c25 = arith.constant 25 : index
    %c0_61 = arith.constant 0 : index
    %195 = vector.load %arg2[%c25, %c0_61] : memref<27x64xf32, #tpu.memory_space<vmem>>, vector<1x64xf32>
    %196 = vector.shape_cast %195 : vector<1x64xf32> to vector<64xf32>
    %197 = vector.shape_cast %196 : vector<64xf32> to vector<1x1x64xf32>
    %198 = vector.broadcast %197 : vector<1x1x64xf32> to vector<8x8x64xf32>
    %199 = arith.mulf %194, %198 : vector<8x8x64xf32>
    %200 = arith.addf %193, %199 : vector<8x8x64xf32>
    %201 = vector.extract_strided_slice %186 {offsets = [0, 0, 16], sizes = [8, 8, 64], strides = [1, 1, 1]} : vector<8x8x80xf32> to vector<8x8x64xf32>
    %c26 = arith.constant 26 : index
    %c0_62 = arith.constant 0 : index
    %202 = vector.load %arg2[%c26, %c0_62] : memref<27x64xf32, #tpu.memory_space<vmem>>, vector<1x64xf32>
    %203 = vector.shape_cast %202 : vector<1x64xf32> to vector<64xf32>
    %204 = vector.shape_cast %203 : vector<64xf32> to vector<1x1x64xf32>
    %205 = vector.broadcast %204 : vector<1x1x64xf32> to vector<8x8x64xf32>
    %206 = arith.mulf %201, %205 : vector<8x8x64xf32>
    %207 = arith.addf %200, %206 : vector<8x8x64xf32>
    %c0_63 = arith.constant 0 : index
    %c0_64 = arith.constant 0 : index
    %208 = vector.load %arg3[%c0_63, %c0_64] : memref<1x64xf32, #tpu.memory_space<vmem>>, vector<1x64xf32>
    %209 = vector.shape_cast %208 : vector<1x64xf32> to vector<64xf32>
    %210 = vector.shape_cast %209 : vector<64xf32> to vector<1x1x64xf32>
    %211 = vector.broadcast %210 : vector<1x1x64xf32> to vector<8x8x64xf32>
    %212 = arith.addf %207, %211 : vector<8x8x64xf32>
    %cst_65 = arith.constant 0.000000e+00 : f32
    %213 = vector.broadcast %cst_65 : f32 to vector<8x8x64xf32>
    %214 = vector.extract_strided_slice %212 {offsets = [0, 0, 3], sizes = [8, 8, 61], strides = [1, 1, 1]} : vector<8x8x64xf32> to vector<8x8x61xf32>
    %215 = vector.extract_strided_slice %212 {offsets = [0, 0, 0], sizes = [8, 8, 3], strides = [1, 1, 1]} : vector<8x8x64xf32> to vector<8x8x3xf32>
    %216 = tpu.concatenate %214, %215 in 2 : vector<8x8x61xf32>, vector<8x8x3xf32> -> vector<8x8x64xf32>
    %c0_66 = arith.constant 0 : index
    %c0_67 = arith.constant 0 : index
    %217 = vector.load %arg4[%c0_66, %c0_67] : memref<11x64xf32, #tpu.memory_space<vmem>>, vector<1x64xf32>
    %218 = vector.shape_cast %217 : vector<1x64xf32> to vector<64xf32>
    %219 = vector.shape_cast %218 : vector<64xf32> to vector<1x1x64xf32>
    %220 = vector.broadcast %219 : vector<1x1x64xf32> to vector<8x8x64xf32>
    %221 = arith.mulf %216, %220 : vector<8x8x64xf32>
    %222 = arith.addf %213, %221 : vector<8x8x64xf32>
    %223 = vector.extract_strided_slice %212 {offsets = [0, 0, 2], sizes = [8, 8, 62], strides = [1, 1, 1]} : vector<8x8x64xf32> to vector<8x8x62xf32>
    %224 = vector.extract_strided_slice %212 {offsets = [0, 0, 0], sizes = [8, 8, 2], strides = [1, 1, 1]} : vector<8x8x64xf32> to vector<8x8x2xf32>
    %225 = tpu.concatenate %223, %224 in 2 : vector<8x8x62xf32>, vector<8x8x2xf32> -> vector<8x8x64xf32>
    %c1_68 = arith.constant 1 : index
    %c0_69 = arith.constant 0 : index
    %226 = vector.load %arg4[%c1_68, %c0_69] : memref<11x64xf32, #tpu.memory_space<vmem>>, vector<1x64xf32>
    %227 = vector.shape_cast %226 : vector<1x64xf32> to vector<64xf32>
    %228 = vector.shape_cast %227 : vector<64xf32> to vector<1x1x64xf32>
    %229 = vector.broadcast %228 : vector<1x1x64xf32> to vector<8x8x64xf32>
    %230 = arith.mulf %225, %229 : vector<8x8x64xf32>
    %231 = arith.addf %222, %230 : vector<8x8x64xf32>
    %232 = vector.extract_strided_slice %212 {offsets = [0, 0, 1], sizes = [8, 8, 63], strides = [1, 1, 1]} : vector<8x8x64xf32> to vector<8x8x63xf32>
    %233 = vector.extract_strided_slice %212 {offsets = [0, 0, 0], sizes = [8, 8, 1], strides = [1, 1, 1]} : vector<8x8x64xf32> to vector<8x8x1xf32>
    %234 = tpu.concatenate %232, %233 in 2 : vector<8x8x63xf32>, vector<8x8x1xf32> -> vector<8x8x64xf32>
    %c2_70 = arith.constant 2 : index
    %c0_71 = arith.constant 0 : index
    %235 = vector.load %arg4[%c2_70, %c0_71] : memref<11x64xf32, #tpu.memory_space<vmem>>, vector<1x64xf32>
    %236 = vector.shape_cast %235 : vector<1x64xf32> to vector<64xf32>
    %237 = vector.shape_cast %236 : vector<64xf32> to vector<1x1x64xf32>
    %238 = vector.broadcast %237 : vector<1x1x64xf32> to vector<8x8x64xf32>
    %239 = arith.mulf %234, %238 : vector<8x8x64xf32>
    %240 = arith.addf %231, %239 : vector<8x8x64xf32>
    %c3_72 = arith.constant 3 : index
    %c0_73 = arith.constant 0 : index
    %241 = vector.load %arg4[%c3_72, %c0_73] : memref<11x64xf32, #tpu.memory_space<vmem>>, vector<1x64xf32>
    %242 = vector.shape_cast %241 : vector<1x64xf32> to vector<64xf32>
    %243 = vector.shape_cast %242 : vector<64xf32> to vector<1x1x64xf32>
    %244 = vector.broadcast %243 : vector<1x1x64xf32> to vector<8x8x64xf32>
    %245 = arith.mulf %212, %244 : vector<8x8x64xf32>
    %246 = arith.addf %240, %245 : vector<8x8x64xf32>
    %247 = vector.extract_strided_slice %212 {offsets = [0, 0, 63], sizes = [8, 8, 1], strides = [1, 1, 1]} : vector<8x8x64xf32> to vector<8x8x1xf32>
    %248 = vector.extract_strided_slice %212 {offsets = [0, 0, 0], sizes = [8, 8, 63], strides = [1, 1, 1]} : vector<8x8x64xf32> to vector<8x8x63xf32>
    %249 = tpu.concatenate %247, %248 in 2 : vector<8x8x1xf32>, vector<8x8x63xf32> -> vector<8x8x64xf32>
    %c4_74 = arith.constant 4 : index
    %c0_75 = arith.constant 0 : index
    %250 = vector.load %arg4[%c4_74, %c0_75] : memref<11x64xf32, #tpu.memory_space<vmem>>, vector<1x64xf32>
    %251 = vector.shape_cast %250 : vector<1x64xf32> to vector<64xf32>
    %252 = vector.shape_cast %251 : vector<64xf32> to vector<1x1x64xf32>
    %253 = vector.broadcast %252 : vector<1x1x64xf32> to vector<8x8x64xf32>
    %254 = arith.mulf %249, %253 : vector<8x8x64xf32>
    %255 = arith.addf %246, %254 : vector<8x8x64xf32>
    %256 = vector.extract_strided_slice %212 {offsets = [0, 0, 62], sizes = [8, 8, 2], strides = [1, 1, 1]} : vector<8x8x64xf32> to vector<8x8x2xf32>
    %257 = vector.extract_strided_slice %212 {offsets = [0, 0, 0], sizes = [8, 8, 62], strides = [1, 1, 1]} : vector<8x8x64xf32> to vector<8x8x62xf32>
    %258 = tpu.concatenate %256, %257 in 2 : vector<8x8x2xf32>, vector<8x8x62xf32> -> vector<8x8x64xf32>
    %c5_76 = arith.constant 5 : index
    %c0_77 = arith.constant 0 : index
    %259 = vector.load %arg4[%c5_76, %c0_77] : memref<11x64xf32, #tpu.memory_space<vmem>>, vector<1x64xf32>
    %260 = vector.shape_cast %259 : vector<1x64xf32> to vector<64xf32>
    %261 = vector.shape_cast %260 : vector<64xf32> to vector<1x1x64xf32>
    %262 = vector.broadcast %261 : vector<1x1x64xf32> to vector<8x8x64xf32>
    %263 = arith.mulf %258, %262 : vector<8x8x64xf32>
    %264 = arith.addf %255, %263 : vector<8x8x64xf32>
    %265 = vector.extract_strided_slice %212 {offsets = [0, 0, 61], sizes = [8, 8, 3], strides = [1, 1, 1]} : vector<8x8x64xf32> to vector<8x8x3xf32>
    %266 = vector.extract_strided_slice %212 {offsets = [0, 0, 0], sizes = [8, 8, 61], strides = [1, 1, 1]} : vector<8x8x64xf32> to vector<8x8x61xf32>
    %267 = tpu.concatenate %265, %266 in 2 : vector<8x8x3xf32>, vector<8x8x61xf32> -> vector<8x8x64xf32>
    %c6_78 = arith.constant 6 : index
    %c0_79 = arith.constant 0 : index
    %268 = vector.load %arg4[%c6_78, %c0_79] : memref<11x64xf32, #tpu.memory_space<vmem>>, vector<1x64xf32>
    %269 = vector.shape_cast %268 : vector<1x64xf32> to vector<64xf32>
    %270 = vector.shape_cast %269 : vector<64xf32> to vector<1x1x64xf32>
    %271 = vector.broadcast %270 : vector<1x1x64xf32> to vector<8x8x64xf32>
    %272 = arith.mulf %267, %271 : vector<8x8x64xf32>
    %273 = arith.addf %264, %272 : vector<8x8x64xf32>
    %274 = vector.extract_strided_slice %212 {offsets = [0, 0, 60], sizes = [8, 8, 4], strides = [1, 1, 1]} : vector<8x8x64xf32> to vector<8x8x4xf32>
    %275 = vector.extract_strided_slice %212 {offsets = [0, 0, 0], sizes = [8, 8, 60], strides = [1, 1, 1]} : vector<8x8x64xf32> to vector<8x8x60xf32>
    %276 = tpu.concatenate %274, %275 in 2 : vector<8x8x4xf32>, vector<8x8x60xf32> -> vector<8x8x64xf32>
    %c7_80 = arith.constant 7 : index
    %c0_81 = arith.constant 0 : index
    %277 = vector.load %arg4[%c7_80, %c0_81] : memref<11x64xf32, #tpu.memory_space<vmem>>, vector<1x64xf32>
    %278 = vector.shape_cast %277 : vector<1x64xf32> to vector<64xf32>
    %279 = vector.shape_cast %278 : vector<64xf32> to vector<1x1x64xf32>
    %280 = vector.broadcast %279 : vector<1x1x64xf32> to vector<8x8x64xf32>
    %281 = arith.mulf %276, %280 : vector<8x8x64xf32>
    %282 = arith.addf %273, %281 : vector<8x8x64xf32>
    %283 = vector.extract_strided_slice %212 {offsets = [0, 0, 59], sizes = [8, 8, 5], strides = [1, 1, 1]} : vector<8x8x64xf32> to vector<8x8x5xf32>
    %284 = vector.extract_strided_slice %212 {offsets = [0, 0, 0], sizes = [8, 8, 59], strides = [1, 1, 1]} : vector<8x8x64xf32> to vector<8x8x59xf32>
    %285 = tpu.concatenate %283, %284 in 2 : vector<8x8x5xf32>, vector<8x8x59xf32> -> vector<8x8x64xf32>
    %c8_82 = arith.constant 8 : index
    %c0_83 = arith.constant 0 : index
    %286 = vector.load %arg4[%c8_82, %c0_83] : memref<11x64xf32, #tpu.memory_space<vmem>>, vector<1x64xf32>
    %287 = vector.shape_cast %286 : vector<1x64xf32> to vector<64xf32>
    %288 = vector.shape_cast %287 : vector<64xf32> to vector<1x1x64xf32>
    %289 = vector.broadcast %288 : vector<1x1x64xf32> to vector<8x8x64xf32>
    %290 = arith.mulf %285, %289 : vector<8x8x64xf32>
    %291 = arith.addf %282, %290 : vector<8x8x64xf32>
    %292 = vector.extract_strided_slice %212 {offsets = [0, 0, 58], sizes = [8, 8, 6], strides = [1, 1, 1]} : vector<8x8x64xf32> to vector<8x8x6xf32>
    %293 = vector.extract_strided_slice %212 {offsets = [0, 0, 0], sizes = [8, 8, 58], strides = [1, 1, 1]} : vector<8x8x64xf32> to vector<8x8x58xf32>
    %294 = tpu.concatenate %292, %293 in 2 : vector<8x8x6xf32>, vector<8x8x58xf32> -> vector<8x8x64xf32>
    %c9_84 = arith.constant 9 : index
    %c0_85 = arith.constant 0 : index
    %295 = vector.load %arg4[%c9_84, %c0_85] : memref<11x64xf32, #tpu.memory_space<vmem>>, vector<1x64xf32>
    %296 = vector.shape_cast %295 : vector<1x64xf32> to vector<64xf32>
    %297 = vector.shape_cast %296 : vector<64xf32> to vector<1x1x64xf32>
    %298 = vector.broadcast %297 : vector<1x1x64xf32> to vector<8x8x64xf32>
    %299 = arith.mulf %294, %298 : vector<8x8x64xf32>
    %300 = arith.addf %291, %299 : vector<8x8x64xf32>
    %301 = vector.extract_strided_slice %212 {offsets = [0, 0, 57], sizes = [8, 8, 7], strides = [1, 1, 1]} : vector<8x8x64xf32> to vector<8x8x7xf32>
    %302 = vector.extract_strided_slice %212 {offsets = [0, 0, 0], sizes = [8, 8, 57], strides = [1, 1, 1]} : vector<8x8x64xf32> to vector<8x8x57xf32>
    %303 = tpu.concatenate %301, %302 in 2 : vector<8x8x7xf32>, vector<8x8x57xf32> -> vector<8x8x64xf32>
    %c10_86 = arith.constant 10 : index
    %c0_87 = arith.constant 0 : index
    %304 = vector.load %arg4[%c10_86, %c0_87] : memref<11x64xf32, #tpu.memory_space<vmem>>, vector<1x64xf32>
    %305 = vector.shape_cast %304 : vector<1x64xf32> to vector<64xf32>
    %306 = vector.shape_cast %305 : vector<64xf32> to vector<1x1x64xf32>
    %307 = vector.broadcast %306 : vector<1x1x64xf32> to vector<8x8x64xf32>
    %308 = arith.mulf %303, %307 : vector<8x8x64xf32>
    %309 = arith.addf %300, %308 : vector<8x8x64xf32>
    %310 = vector.extract_strided_slice %309 {offsets = [0, 0, 0], sizes = [1, 8, 64], strides = [1, 1, 1]} : vector<8x8x64xf32> to vector<1x8x64xf32>
    %311 = vector.shape_cast %310 : vector<1x8x64xf32> to vector<8x64xf32>
    %312 = vector.extract_strided_slice %309 {offsets = [1, 0, 0], sizes = [1, 8, 64], strides = [1, 1, 1]} : vector<8x8x64xf32> to vector<1x8x64xf32>
    %313 = vector.shape_cast %312 : vector<1x8x64xf32> to vector<8x64xf32>
    %314 = vector.extract_strided_slice %309 {offsets = [2, 0, 0], sizes = [1, 8, 64], strides = [1, 1, 1]} : vector<8x8x64xf32> to vector<1x8x64xf32>
    %315 = vector.shape_cast %314 : vector<1x8x64xf32> to vector<8x64xf32>
    %316 = vector.extract_strided_slice %309 {offsets = [3, 0, 0], sizes = [1, 8, 64], strides = [1, 1, 1]} : vector<8x8x64xf32> to vector<1x8x64xf32>
    %317 = vector.shape_cast %316 : vector<1x8x64xf32> to vector<8x64xf32>
    %318 = vector.extract_strided_slice %309 {offsets = [4, 0, 0], sizes = [1, 8, 64], strides = [1, 1, 1]} : vector<8x8x64xf32> to vector<1x8x64xf32>
    %319 = vector.shape_cast %318 : vector<1x8x64xf32> to vector<8x64xf32>
    %320 = vector.extract_strided_slice %309 {offsets = [5, 0, 0], sizes = [1, 8, 64], strides = [1, 1, 1]} : vector<8x8x64xf32> to vector<1x8x64xf32>
    %321 = vector.shape_cast %320 : vector<1x8x64xf32> to vector<8x64xf32>
    %322 = vector.extract_strided_slice %309 {offsets = [6, 0, 0], sizes = [1, 8, 64], strides = [1, 1, 1]} : vector<8x8x64xf32> to vector<1x8x64xf32>
    %323 = vector.shape_cast %322 : vector<1x8x64xf32> to vector<8x64xf32>
    %324 = vector.extract_strided_slice %309 {offsets = [7, 0, 0], sizes = [1, 8, 64], strides = [1, 1, 1]} : vector<8x8x64xf32> to vector<1x8x64xf32>
    %325 = vector.shape_cast %324 : vector<1x8x64xf32> to vector<8x64xf32>
    %326 = tpu.concatenate %311, %313, %315, %317, %319, %321, %323, %325 in 1 : vector<8x64xf32>, vector<8x64xf32>, vector<8x64xf32>, vector<8x64xf32>, vector<8x64xf32>, vector<8x64xf32>, vector<8x64xf32>, vector<8x64xf32> -> vector<8x512xf32>
    %c0_88 = arith.constant 0 : index
    %c0_89 = arith.constant 0 : index
    %327 = vector.load %arg5[%c0_88, %c0_89] : memref<1x512xf32, #tpu.memory_space<vmem>>, vector<1x512xf32>
    %328 = vector.shape_cast %327 : vector<1x512xf32> to vector<512xf32>
    %329 = vector.shape_cast %328 : vector<512xf32> to vector<1x512xf32>
    %330 = vector.broadcast %329 : vector<1x512xf32> to vector<8x512xf32>
    %331 = arith.addf %326, %330 : vector<8x512xf32>
    %c0_90 = arith.constant 0 : index
    %c0_91 = arith.constant 0 : index
    %c0_92 = arith.constant 0 : index
    %332 = vector.load %arg6[%c0_90, %c0_91, %c0_92] : memref<1x8x512xf32, #tpu.memory_space<vmem>>, vector<1x8x512xf32>
    %333 = vector.shape_cast %332 : vector<1x8x512xf32> to vector<8x512xf32>
    %334 = vector.shape_cast %331 : vector<8x512xf32> to vector<1x8x512xf32>
    tpu.vector_store %arg6[%c0_90, %c0_91, %c0_92], %334 {strides = array<i32>} : memref<1x8x512xf32, #tpu.memory_space<vmem>>, vector<1x8x512xf32>,
    return
  }
  func.func @transform_0(%arg0: i32) -> (i32, i32, i32, i32) {
    %c0_i32 = arith.constant 0 : i32
    %c0_i32_0 = arith.constant 0 : i32
    %c0_i32_1 = arith.constant 0 : i32
    %c0_i32_2 = arith.constant 0 : i32
    return %arg0, %c0_i32, %c0_i32_0, %c0_i32_1 : i32, i32, i32, i32
  }
  func.func @transform_1(%arg0: i32) -> (i32, i32) {
    %c0_i32 = arith.constant 0 : i32
    %c0_i32_0 = arith.constant 0 : i32
    %c0_i32_1 = arith.constant 0 : i32
    return %c0_i32, %c0_i32_0 : i32, i32
  }
  func.func @transform_2(%arg0: i32) -> (i32, i32) {
    %c0_i32 = arith.constant 0 : i32
    %c0_i32_0 = arith.constant 0 : i32
    %c0_i32_1 = arith.constant 0 : i32
    return %c0_i32, %c0_i32_0 : i32, i32
  }
  func.func @transform_3(%arg0: i32) -> (i32, i32) {
    %c0_i32 = arith.constant 0 : i32
    %c0_i32_0 = arith.constant 0 : i32
    %c0_i32_1 = arith.constant 0 : i32
    return %c0_i32, %c0_i32_0 : i32, i32
  }
  func.func @transform_4(%arg0: i32) -> (i32, i32) {
    %c0_i32 = arith.constant 0 : i32
    %c0_i32_0 = arith.constant 0 : i32
    %c0_i32_1 = arith.constant 0 : i32
    return %c0_i32, %c0_i32_0 : i32, i32
  }
  func.func @transform_5(%arg0: i32) -> (i32, i32, i32) {
    %c0_i32 = arith.constant 0 : i32
    %c0_i32_0 = arith.constant 0 : i32
    %c0_i32_1 = arith.constant 0 : i32
    return %arg0, %c0_i32, %c0_i32_0 : i32, i32, i32
  }
}

</mosaic_0001>

<llo_original>
// kernel: tpu_custom_call.1
$region0: #{tpu_custom_call.1}
  #allocation0 [shape = 'u32[]', space=smem, size = 0x4, offset = 0x4, fixed_abs, tag = 'smem constant byte address 0x4 - core index']
  #allocation1 [shape = 'u32[72,128]{1,0:T(1,128)}', space=vmem, size = 0x9000, scoped, tag = 'internal scratch']
  %s0 = inlined_call_operand.vmem [shape: f32[2,10,10,80], index: 0, kind: input, shape index: {}]
  %s1 = inlined_call_operand.vmem [shape: f32[27,64], index: 1, kind: input, shape index: {}]
  %s2 = inlined_call_operand.vmem [shape: f32[1,64], index: 2, kind: input, shape index: {}]
  %s3 = inlined_call_operand.vmem [shape: f32[11,64], index: 3, kind: input, shape index: {}]
  %s4 = inlined_call_operand.vmem [shape: f32[1,512], index: 4, kind: input, shape index: {}]
  %s5 = inlined_call_operand.hbm [shape: f32[2,8,512], index: 5, kind: output, shape index: {}]
  %s6 = sld [smem:[#allocation0]]
  $region53: #{tpu_custom_call.1} parent=0
    _
  %s8 = ssub.s32 1, %s6
  %s9 = scalar_select 0, %s8, %s6
  $region1: #{tpu_custom_call.1} parent=0
    #allocation2 [shape = 'u8[32768]{0}', space=vmem, size = 0x8000, scoped, tag = 'output window, operand 0']
    #allocation3 [shape = 's32[2]{0}', space=sflag, size = 0x8, scoped, tag = 'scoped memory for tpu_custom_call.1']
    %10 = vsyncpa [#allocation3], 0
    %s11 = scalar_lea.sflag [#allocation3], 1
    %12 = vsyncpa %s11, 0
    loop: start=0, step=1, limit=4
    $region2: #{tpu_custom_call.1} parent=1 // loop_pre_header
      _
    $region3: #{tpu_custom_call.1} parent=1 // loop_header
      %s14 = sphi 0, %s18
      %p15 = scmp.ge.s32.totalorder %s14, 4
      %s24 = sphi 0, %s26
      %s27 = sphi 0, %s24
      %s28 = sphi 0, %s27
      %s44 = sphi 0, %s28
      %s48 = sphi 0, %s48
      %s50 = sphi 0, %s48
      %s51 = sphi 0, %s50
      %s65 = sphi 0, %s51
      %s69 = sphi 0, %s69
      %s71 = sphi 0, %s69
      %s72 = sphi 0, %s71
      %s86 = sphi 0, %s72
      %s90 = sphi 0, %s90
      %s92 = sphi 0, %s90
      %s93 = sphi 0, %s92
      %s107 = sphi 0, %s93
      %s111 = sphi 0, %s111
      %s113 = sphi 0, %s111
      %s114 = sphi 0, %s113
      %s128 = sphi 0, %s114
      %s134 = sphi 0, %s136
      %s137 = sphi 0, %s134
      %s138 = sphi 0, %s137
      %s154 = sphi 0, %s138
    $region4: #{tpu_custom_call.1} parent=1 // loop_header_branch
      %17 = sbr.rel (%p15) target = $region8
    $region5: #{tpu_custom_call.1} parent=1 // loop_body
      %s19 = ssub.s32 %s14, 1
      %s20 = ssub.s32 %s14, 2
      %s21 = sadd.s32 %s14, 1
      %s22 = ssub.s32 %s14, %s21
      %p23 = scmp.eq.s32.totalorder %s22, 0
      %s25 = sadd.s32 %s24, 1
      %s26 = scalar_select %p23, %s24, %s25
      %p29 = pneg %p23
      %p30 = scmp.eq.s32.totalorder %s14, 1
      %p31 = por %p29, %p30
      %p32 = scmp.ne.s32.totalorder %s24, %s27
      %p33 = scmp.eq.s32.totalorder %s14, 0
      %p34 = por %p32, %p33
      %p35 = scmp.ne.s32.totalorder %s24, %s27
      %p36 = scmp.eq.s32.totalorder %s19, 1
      %p37 = por %p35, %p36
      %p38 = scmp.ne.s32.totalorder %s27, %s28
      %p39 = scmp.eq.s32.totalorder %s19, 0
      %p40 = por %p38, %p39
      %p41 = scmp.ne.s32.totalorder %s27, %s28
      %p42 = scmp.eq.s32.totalorder %s20, 1
      %p43 = por %p41, %p42
      %p45 = scmp.ne.s32.totalorder %s28, %s44
      %p46 = scmp.eq.s32.totalorder %s20, 0
      %p47 = por %p45, %p46
      %s49 = sadd.s32 %s48, 1
      %p52 = scmp.eq.s32.totalorder %s14, 1
      %p53 = scmp.ne.s32.totalorder %s48, %s50
      %p54 = scmp.eq.s32.totalorder %s14, 0
      %p55 = por %p53, %p54
      %p56 = scmp.ne.s32.totalorder %s48, %s50
      %p57 = scmp.eq.s32.totalorder %s19, 1
      %p58 = por %p56, %p57
      %p59 = scmp.ne.s32.totalorder %s50, %s51
      %p60 = scmp.eq.s32.totalorder %s19, 0
      %p61 = por %p59, %p60
      %p62 = scmp.ne.s32.totalorder %s50, %s51
      %p63 = scmp.eq.s32.totalorder %s20, 1
      %p64 = por %p62, %p63
      %p66 = scmp.ne.s32.totalorder %s51, %s65
      %p67 = scmp.eq.s32.totalorder %s20, 0
      %p68 = por %p66, %p67
      %s70 = sadd.s32 %s69, 1
      %p73 = scmp.eq.s32.totalorder %s14, 1
      %p74 = scmp.ne.s32.totalorder %s69, %s71
      %p75 = scmp.eq.s32.totalorder %s14, 0
      %p76 = por %p74, %p75
      %p77 = scmp.ne.s32.totalorder %s69, %s71
      %p78 = scmp.eq.s32.totalorder %s19, 1
      %p79 = por %p77, %p78
      %p80 = scmp.ne.s32.totalorder %s71, %s72
      %p81 = scmp.eq.s32.totalorder %s19, 0
      %p82 = por %p80, %p81
      %p83 = scmp.ne.s32.totalorder %s71, %s72
      %p84 = scmp.eq.s32.totalorder %s20, 1
      %p85 = por %p83, %p84
      %p87 = scmp.ne.s32.totalorder %s72, %s86
      %p88 = scmp.eq.s32.totalorder %s20, 0
      %p89 = por %p87, %p88
      %s91 = sadd.s32 %s90, 1
      %p94 = scmp.eq.s32.totalorder %s14, 1
      %p95 = scmp.ne.s32.totalorder %s90, %s92
      %p96 = scmp.eq.s32.totalorder %s14, 0
      %p97 = por %p95, %p96
      %p98 = scmp.ne.s32.totalorder %s90, %s92
      %p99 = scmp.eq.s32.totalorder %s19, 1
      %p100 = por %p98, %p99
      %p101 = scmp.ne.s32.totalorder %s92, %s93
      %p102 = scmp.eq.s32.totalorder %s19, 0
      %p103 = por %p101, %p102
      %p104 = scmp.ne.s32.totalorder %s92, %s93
      %p105 = scmp.eq.s32.totalorder %s20, 1
      %p106 = por %p104, %p105
      %p108 = scmp.ne.s32.totalorder %s93, %s107
      %p109 = scmp.eq.s32.totalorder %s20, 0
      %p110 = por %p108, %p109
      %s112 = sadd.s32 %s111, 1
      %p115 = scmp.eq.s32.totalorder %s14, 1
      %p116 = scmp.ne.s32.totalorder %s111, %s113
      %p117 = scmp.eq.s32.totalorder %s14, 0
      %p118 = por %p116, %p117
      %p119 = scmp.ne.s32.totalorder %s111, %s113
      %p120 = scmp.eq.s32.totalorder %s19, 1
      %p121 = por %p119, %p120
      %p122 = scmp.ne.s32.totalorder %s113, %s114
      %p123 = scmp.eq.s32.totalorder %s19, 0
      %p124 = por %p122, %p123
      %p125 = scmp.ne.s32.totalorder %s113, %s114
      %p126 = scmp.eq.s32.totalorder %s20, 1
      %p127 = por %p125, %p126
      %p129 = scmp.ne.s32.totalorder %s114, %s128
      %p130 = scmp.eq.s32.totalorder %s20, 0
      %p131 = por %p129, %p130
      %s132 = ssub.s32 %s14, %s21
      %p133 = scmp.eq.s32.totalorder %s132, 0
      %s135 = sadd.s32 %s134, 1
      %s136 = scalar_select %p133, %s134, %s135
      %p139 = pneg %p133
      %p140 = scmp.eq.s32.totalorder %s14, 1
      %p141 = por %p139, %p140
      %p142 = scmp.ne.s32.totalorder %s134, %s137
      %p143 = scmp.eq.s32.totalorder %s14, 0
      %p144 = por %p142, %p143
      %p145 = scmp.ne.s32.totalorder %s134, %s137
      %p146 = scmp.eq.s32.totalorder %s19, 1
      %p147 = por %p145, %p146
      %p148 = scmp.ne.s32.totalorder %s137, %s138
      %p149 = scmp.eq.s32.totalorder %s19, 0
      %p150 = por %p148, %p149
      %p151 = scmp.ne.s32.totalorder %s137, %s138
      %p152 = scmp.eq.s32.totalorder %s20, 1
      %p153 = por %p151, %p152
      %p155 = scmp.ne.s32.totalorder %s138, %s154
      %p156 = scmp.eq.s32.totalorder %s20, 0
      %p157 = por %p155, %p156
      %p158 = scmp.le.s32.totalorder 1, %s14
      %p159 = scmp.lt.s32.totalorder %s14, 3
      %p160 = pnand %p158, %p159
      %p161 = pneg %p160
      // Predicated region
      $region9: #{tpu_custom_call.1} parent=5 // pred_check
        _
      $region10: #{tpu_custom_call.1} parent=5 // pred_check_branch
        %163 = sbr.rel (%p160) target = $region12
      $region11: #{tpu_custom_call.1} parent=5 // pred_region
        %s164 = ssub.s32 %s14, 1
        // Predicated region
        $region13: #{tpu_custom_call.1} parent=11 // pred_check
          %p165 = pneg %p61
        $region14: #{tpu_custom_call.1} parent=11 // pred_check_branch
          %167 = sbr.rel (%p165) target = $region16
        $region15: #{tpu_custom_call.1} parent=11 // pred_region
          _
        $region16: #{tpu_custom_call.1} parent=11 // pred_fallthru
          _
        // Predicated region
        $region17: #{tpu_custom_call.1} parent=11 // pred_check
          %p168 = pneg %p82
        $region18: #{tpu_custom_call.1} parent=11 // pred_check_branch
          %170 = sbr.rel (%p168) target = $region20
        $region19: #{tpu_custom_call.1} parent=11 // pred_region
          _
        $region20: #{tpu_custom_call.1} parent=11 // pred_fallthru
          _
        // Predicated region
        $region21: #{tpu_custom_call.1} parent=11 // pred_check
          %p171 = pneg %p103
        $region22: #{tpu_custom_call.1} parent=11 // pred_check_branch
          %173 = sbr.rel (%p171) target = $region24
        $region23: #{tpu_custom_call.1} parent=11 // pred_region
          _
        $region24: #{tpu_custom_call.1} parent=11 // pred_fallthru
          _
        // Predicated region
        $region25: #{tpu_custom_call.1} parent=11 // pred_check
          %p174 = pneg %p124
        $region26: #{tpu_custom_call.1} parent=11 // pred_check_branch
          %176 = sbr.rel (%p174) target = $region28
        $region27: #{tpu_custom_call.1} parent=11 // pred_region
          _
        $region28: #{tpu_custom_call.1} parent=11 // pred_fallthru
          _
      $region12: #{tpu_custom_call.1} parent=5 // pred_fallthru
        _
      %p177 = scmp.lt.s32.totalorder %s14, 2
      // Predicated region
      $region29: #{tpu_custom_call.1} parent=5 // pred_check
        %p178 = pneg %p177
      $region30: #{tpu_custom_call.1} parent=5 // pred_check_branch
        %180 = sbr.rel (%p178) target = $region32
      $region31: #{tpu_custom_call.1} parent=5 // pred_region
        // Predicated region
        $region33: #{tpu_custom_call.1} parent=31 // pred_check
          %p181 = pneg %p34
        $region34: #{tpu_custom_call.1} parent=31 // pred_check_branch
          %183 = sbr.rel (%p181) target = $region36
        $region35: #{tpu_custom_call.1} parent=31 // pred_region
          %p184 = scmp.lt.s32.totalorder %s14, 1
          %s185 = scalar_select %p184, %s14, 1
          %s186 = smul.addr %s185, 20
          %s187 = smul.addr %s186, 8
          %s188 = scalar_lea.vmem %s0, %s187
        $region36: #{tpu_custom_call.1} parent=31 // pred_fallthru
          _
      $region32: #{tpu_custom_call.1} parent=5 // pred_fallthru
        _
      %p189 = scmp.le.s32.totalorder 1, %s14
      %p190 = scmp.lt.s32.totalorder %s14, 3
      %p191 = pnand %p189, %p190
      %p192 = pneg %p191
      // Predicated region
      $region37: #{tpu_custom_call.1} parent=5 // pred_check
        _
      $region38: #{tpu_custom_call.1} parent=5 // pred_check_branch
        %194 = sbr.rel (%p191) target = $region40
      $region39: #{tpu_custom_call.1} parent=5 // pred_region
        %s195 = ssub.s32 %s14, 1
        %p196 = scmp.lt.s32.totalorder %s19, 1
        %s197 = scalar_select %p196, %s19, 1
        %s198 = smul.addr %s197, 20
        %s199 = smul.addr %s198, 8
        %s200 = scalar_lea.vmem %s0, %s199
        %p201 = pneg %p40
        %p202 = pneg %p37
        %p203 = pneg %p61
        %p204 = pneg %p58
        %p205 = pneg %p82
        %p206 = pneg %p79
        %p207 = pneg %p103
        %p208 = pneg %p100
        %p209 = pneg %p124
        %p210 = pneg %p121
        %p211 = pneg %p150
        %p212 = pneg %p147
        %s213 = sand.u32 %s137, 1
        %s214 = scalar_lea.sflag [#allocation3], %s213
        %s215 = sand.u32 %s137, 1
        %s216 = smul.addr %s215, 32
        %s217 = scalar_lea.vmem [#allocation2], %s216
        %p218 = scmp.lt.s32.totalorder %s19, 1
        %s219 = scalar_select %p218, %s19, 1
        %s220 = smul.addr %s219, 20
        %s221 = smul.addr %s220, 8
        %s222 = scalar_lea.vmem %s0, %s221
        %v223 = vld [vmem:[%s222] sm:$0xff]
        %v224 = vld [vmem:[%s222 + $0x10] sm:$0xff]
        %v225 = vld [vmem:[%s222 + $0x20] sm:$0xff]
        %v226 = vld [vmem:[%s222 + $0x30] sm:$0xff]
        %v227 = vld [vmem:[%s222 + $0x40] sm:$0xff]
        %v228 = vld [vmem:[%s222 + $0x50] sm:$0xff]
        %v229 = vld [vmem:[%s222 + $0x60] sm:$0xff]
        %v230 = vld [vmem:[%s222 + $0x70] sm:$0xff]
        %v231 = vld [vmem:[%s1] sm:$0x1]
        %v232 = vperm.slane %v231, 0
        %v233 = vmul.f32 %v223, %v232
        %v234 = vmul.f32 %v224, %v232
        %v235 = vmul.f32 %v225, %v232
        %v236 = vmul.f32 %v226, %v232
        %v237 = vmul.f32 %v227, %v232
        %v238 = vmul.f32 %v228, %v232
        %v239 = vmul.f32 %v229, %v232
        %v240 = vmul.f32 %v230, %v232
        %v241 = vadd.f32 %v233, 0.0
        %v242 = vadd.f32 %v234, 0.0
        %v243 = vadd.f32 %v235, 0.0
        %v244 = vadd.f32 %v236, 0.0
        %v245 = vadd.f32 %v237, 0.0
        %v246 = vadd.f32 %v238, 0.0
        %v247 = vadd.f32 %v239, 0.0
        %v248 = vadd.f32 %v240, 0.0
        %v249 = vld [vmem:[%s1 + $0x1] sm:$0x1]
        %v250 = vperm.slane %v249, 0
        %252 = vrot.lane.b32.xlu0 %v250, 8
        %v253 = vpop.permute.xlu0 %252
        %v255 = vmul.f32 %v223, %v253
        %v256 = vmul.f32 %v224, %v253
        %v257 = vmul.f32 %v225, %v253
        %v258 = vmul.f32 %v226, %v253
        %v259 = vmul.f32 %v227, %v253
        %v260 = vmul.f32 %v228, %v253
        %v261 = vmul.f32 %v229, %v253
        %v262 = vmul.f32 %v230, %v253
        %271 = vrot.lane.b32.xlu0 %v255, 120
        %v272 = vpop.permute.xlu0 %271
        %273 = vrot.lane.b32.xlu0 %v256, 120
        %v274 = vpop.permute.xlu0 %273
        %275 = vrot.lane.b32.xlu0 %v257, 120
        %v276 = vpop.permute.xlu0 %275
        %277 = vrot.lane.b32.xlu0 %v258, 120
        %v278 = vpop.permute.xlu0 %277
        %279 = vrot.lane.b32.xlu0 %v259, 120
        %v280 = vpop.permute.xlu0 %279
        %281 = vrot.lane.b32.xlu0 %v260, 120
        %v282 = vpop.permute.xlu0 %281
        %283 = vrot.lane.b32.xlu0 %v261, 120
        %v284 = vpop.permute.xlu0 %283
        %285 = vrot.lane.b32.xlu0 %v262, 120
        %v286 = vpop.permute.xlu0 %285
        %v295 = vadd.f32 %v241, %v272
        %v296 = vadd.f32 %v242, %v274
        %v297 = vadd.f32 %v243, %v276
        %v298 = vadd.f32 %v244, %v278
        %v299 = vadd.f32 %v245, %v280
        %v300 = vadd.f32 %v246, %v282
        %v301 = vadd.f32 %v247, %v284
        %v302 = vadd.f32 %v248, %v286
        %v303 = vld [vmem:[%s1 + $0x2] sm:$0x1]
        %v304 = vperm.slane %v303, 0
        %306 = vrot.lane.b32.xlu0 %v304, 16
        %v307 = vpop.permute.xlu0 %306
        %v309 = vmul.f32 %v223, %v307
        %v310 = vmul.f32 %v224, %v307
        %v311 = vmul.f32 %v225, %v307
        %v312 = vmul.f32 %v226, %v307
        %v313 = vmul.f32 %v227, %v307
        %v314 = vmul.f32 %v228, %v307
        %v315 = vmul.f32 %v229, %v307
        %v316 = vmul.f32 %v230, %v307
        %325 = vrot.lane.b32.xlu0 %v309, 112
        %v326 = vpop.permute.xlu0 %325
        %327 = vrot.lane.b32.xlu0 %v310, 112
        %v328 = vpop.permute.xlu0 %327
        %329 = vrot.lane.b32.xlu0 %v311, 112
        %v330 = vpop.permute.xlu0 %329
        %331 = vrot.lane.b32.xlu0 %v312, 112
        %v332 = vpop.permute.xlu0 %331
        %333 = vrot.lane.b32.xlu0 %v313, 112
        %v334 = vpop.permute.xlu0 %333
        %335 = vrot.lane.b32.xlu0 %v314, 112
        %v336 = vpop.permute.xlu0 %335
        %337 = vrot.lane.b32.xlu0 %v315, 112
        %v338 = vpop.permute.xlu0 %337
        %339 = vrot.lane.b32.xlu0 %v316, 112
        %v340 = vpop.permute.xlu0 %339
        %v349 = vadd.f32 %v295, %v326
        %v350 = vadd.f32 %v296, %v328
        %v351 = vadd.f32 %v297, %v330
        %v352 = vadd.f32 %v298, %v332
        %v353 = vadd.f32 %v299, %v334
        %v354 = vadd.f32 %v300, %v336
        %v355 = vadd.f32 %v301, %v338
        %v356 = vadd.f32 %v302, %v340
        %s357 = scalar_lea.vmem %s222, 16
        %v358 = vld [vmem:[%s357] sm:$0xff]
        %v359 = vld [vmem:[%s357 + $0x10] sm:$0xff]
        %v360 = vld [vmem:[%s357 + $0x20] sm:$0xff]
        %v361 = vld [vmem:[%s357 + $0x30] sm:$0xff]
        %v362 = vld [vmem:[%s357 + $0x40] sm:$0xff]
        %v363 = vld [vmem:[%s357 + $0x50] sm:$0xff]
        %v364 = vld [vmem:[%s357 + $0x60] sm:$0xff]
        %v365 = vld [vmem:[%s357 + $0x70] sm:$0xff]
        %v366 = vld [vmem:[%s1 + $0x3] sm:$0x1]
        %v367 = vperm.slane %v366, 0
        %v368 = vmul.f32 %v358, %v367
        %v369 = vmul.f32 %v359, %v367
        %v370 = vmul.f32 %v360, %v367
        %v371 = vmul.f32 %v361, %v367
        %v372 = vmul.f32 %v362, %v367
        %v373 = vmul.f32 %v363, %v367
        %v374 = vmul.f32 %v364, %v367
        %v375 = vmul.f32 %v365, %v367
        %v376 = vadd.f32 %v349, %v368
        %v377 = vadd.f32 %v350, %v369
        %v378 = vadd.f32 %v351, %v370
        %v379 = vadd.f32 %v352, %v371
        %v380 = vadd.f32 %v353, %v372
        %v381 = vadd.f32 %v354, %v373
        %v382 = vadd.f32 %v355, %v374
        %v383 = vadd.f32 %v356, %v375
        %v384 = vld [vmem:[%s1 + $0x4] sm:$0x1]
        %v385 = vperm.slane %v384, 0
        %387 = vrot.lane.b32.xlu0 %v385, 8
        %v388 = vpop.permute.xlu0 %387
        %v390 = vmul.f32 %v358, %v388
        %v391 = vmul.f32 %v359, %v388
        %v392 = vmul.f32 %v360, %v388
        %v393 = vmul.f32 %v361, %v388
        %v394 = vmul.f32 %v362, %v388
        %v395 = vmul.f32 %v363, %v388
        %v396 = vmul.f32 %v364, %v388
        %v397 = vmul.f32 %v365, %v388
        %406 = vrot.lane.b32.xlu0 %v390, 120
        %v407 = vpop.permute.xlu0 %406
        %408 = vrot.lane.b32.xlu0 %v391, 120
        %v409 = vpop.permute.xlu0 %408
        %410 = vrot.lane.b32.xlu0 %v392, 120
        %v411 = vpop.permute.xlu0 %410
        %412 = vrot.lane.b32.xlu0 %v393, 120
        %v413 = vpop.permute.xlu0 %412
        %414 = vrot.lane.b32.xlu0 %v394, 120
        %v415 = vpop.permute.xlu0 %414
        %416 = vrot.lane.b32.xlu0 %v395, 120
        %v417 = vpop.permute.xlu0 %416
        %418 = vrot.lane.b32.xlu0 %v396, 120
        %v419 = vpop.permute.xlu0 %418
        %420 = vrot.lane.b32.xlu0 %v397, 120
        %v421 = vpop.permute.xlu0 %420
        %v430 = vadd.f32 %v376, %v407
        %v431 = vadd.f32 %v377, %v409
        %v432 = vadd.f32 %v378, %v411
        %v433 = vadd.f32 %v379, %v413
        %v434 = vadd.f32 %v380, %v415
        %v435 = vadd.f32 %v381, %v417
        %v436 = vadd.f32 %v382, %v419
        %v437 = vadd.f32 %v383, %v421
        %v438 = vld [vmem:[%s1 + $0x5] sm:$0x1]
        %v439 = vperm.slane %v438, 0
        %441 = vrot.lane.b32.xlu0 %v439, 16
        %v442 = vpop.permute.xlu0 %441
        %v444 = vmul.f32 %v358, %v442
        %v445 = vmul.f32 %v359, %v442
        %v446 = vmul.f32 %v360, %v442
        %v447 = vmul.f32 %v361, %v442
        %v448 = vmul.f32 %v362, %v442
        %v449 = vmul.f32 %v363, %v442
        %v450 = vmul.f32 %v364, %v442
        %v451 = vmul.f32 %v365, %v442
        %460 = vrot.lane.b32.xlu0 %v444, 112
        %v461 = vpop.permute.xlu0 %460
        %462 = vrot.lane.b32.xlu0 %v445, 112
        %v463 = vpop.permute.xlu0 %462
        %464 = vrot.lane.b32.xlu0 %v446, 112
        %v465 = vpop.permute.xlu0 %464
        %466 = vrot.lane.b32.xlu0 %v447, 112
        %v467 = vpop.permute.xlu0 %466
        %468 = vrot.lane.b32.xlu0 %v448, 112
        %v469 = vpop.permute.xlu0 %468
        %470 = vrot.lane.b32.xlu0 %v449, 112
        %v471 = vpop.permute.xlu0 %470
        %472 = vrot.lane.b32.xlu0 %v450, 112
        %v473 = vpop.permute.xlu0 %472
        %474 = vrot.lane.b32.xlu0 %v451, 112
        %v475 = vpop.permute.xlu0 %474
        %v484 = vadd.f32 %v430, %v461
        %v485 = vadd.f32 %v431, %v463
        %v486 = vadd.f32 %v432, %v465
        %v487 = vadd.f32 %v433, %v467
        %v488 = vadd.f32 %v434, %v469
        %v489 = vadd.f32 %v435, %v471
        %v490 = vadd.f32 %v436, %v473
        %v491 = vadd.f32 %v437, %v475
        %s492 = scalar_lea.vmem %s222, 32
        %v493 = vld [vmem:[%s492] sm:$0xff]
        %v494 = vld [vmem:[%s492 + $0x10] sm:$0xff]
        %v495 = vld [vmem:[%s492 + $0x20] sm:$0xff]
        %v496 = vld [vmem:[%s492 + $0x30] sm:$0xff]
        %v497 = vld [vmem:[%s492 + $0x40] sm:$0xff]
        %v498 = vld [vmem:[%s492 + $0x50] sm:$0xff]
        %v499 = vld [vmem:[%s492 + $0x60] sm:$0xff]
        %v500 = vld [vmem:[%s492 + $0x70] sm:$0xff]
        %v501 = vld [vmem:[%s1 + $0x6] sm:$0x1]
        %v502 = vperm.slane %v501, 0
        %v503 = vmul.f32 %v493, %v502
        %v504 = vmul.f32 %v494, %v502
        %v505 = vmul.f32 %v495, %v502
        %v506 = vmul.f32 %v496, %v502
        %v507 = vmul.f32 %v497, %v502
        %v508 = vmul.f32 %v498, %v502
        %v509 = vmul.f32 %v499, %v502
        %v510 = vmul.f32 %v500, %v502
        %v511 = vadd.f32 %v484, %v503
        %v512 = vadd.f32 %v485, %v504
        %v513 = vadd.f32 %v486, %v505
        %v514 = vadd.f32 %v487, %v506
        %v515 = vadd.f32 %v488, %v507
        %v516 = vadd.f32 %v489, %v508
        %v517 = vadd.f32 %v490, %v509
        %v518 = vadd.f32 %v491, %v510
        %v519 = vld [vmem:[%s1 + $0x7] sm:$0x1]
        %v520 = vperm.slane %v519, 0
        %522 = vrot.lane.b32.xlu0 %v520, 8
        %v523 = vpop.permute.xlu0 %522
        %v525 = vmul.f32 %v493, %v523
        %v526 = vmul.f32 %v494, %v523
        %v527 = vmul.f32 %v495, %v523
        %v528 = vmul.f32 %v496, %v523
        %v529 = vmul.f32 %v497, %v523
        %v530 = vmul.f32 %v498, %v523
        %v531 = vmul.f32 %v499, %v523
        %v532 = vmul.f32 %v500, %v523
        %541 = vrot.lane.b32.xlu0 %v525, 120
        %v542 = vpop.permute.xlu0 %541
        %543 = vrot.lane.b32.xlu0 %v526, 120
        %v544 = vpop.permute.xlu0 %543
        %545 = vrot.lane.b32.xlu0 %v527, 120
        %v546 = vpop.permute.xlu0 %545
        %547 = vrot.lane.b32.xlu0 %v528, 120
        %v548 = vpop.permute.xlu0 %547
        %549 = vrot.lane.b32.xlu0 %v529, 120
        %v550 = vpop.permute.xlu0 %549
        %551 = vrot.lane.b32.xlu0 %v530, 120
        %v552 = vpop.permute.xlu0 %551
        %553 = vrot.lane.b32.xlu0 %v531, 120
        %v554 = vpop.permute.xlu0 %553
        %555 = vrot.lane.b32.xlu0 %v532, 120
        %v556 = vpop.permute.xlu0 %555
        %v565 = vadd.f32 %v511, %v542
        %v566 = vadd.f32 %v512, %v544
        %v567 = vadd.f32 %v513, %v546
        %v568 = vadd.f32 %v514, %v548
        %v569 = vadd.f32 %v515, %v550
        %v570 = vadd.f32 %v516, %v552
        %v571 = vadd.f32 %v517, %v554
        %v572 = vadd.f32 %v518, %v556
        %v573 = vld [vmem:[%s1 + $0x8] sm:$0x1]
        %v574 = vperm.slane %v573, 0
        %576 = vrot.lane.b32.xlu0 %v574, 16
        %v577 = vpop.permute.xlu0 %576
        %v579 = vmul.f32 %v493, %v577
        %v580 = vmul.f32 %v494, %v577
        %v581 = vmul.f32 %v495, %v577
        %v582 = vmul.f32 %v496, %v577
        %v583 = vmul.f32 %v497, %v577
        %v584 = vmul.f32 %v498, %v577
        %v585 = vmul.f32 %v499, %v577
        %v586 = vmul.f32 %v500, %v577
        %595 = vrot.lane.b32.xlu0 %v579, 112
        %v596 = vpop.permute.xlu0 %595
        %597 = vrot.lane.b32.xlu0 %v580, 112
        %v598 = vpop.permute.xlu0 %597
        %599 = vrot.lane.b32.xlu0 %v581, 112
        %v600 = vpop.permute.xlu0 %599
        %601 = vrot.lane.b32.xlu0 %v582, 112
        %v602 = vpop.permute.xlu0 %601
        %603 = vrot.lane.b32.xlu0 %v583, 112
        %v604 = vpop.permute.xlu0 %603
        %605 = vrot.lane.b32.xlu0 %v584, 112
        %v606 = vpop.permute.xlu0 %605
        %607 = vrot.lane.b32.xlu0 %v585, 112
        %v608 = vpop.permute.xlu0 %607
        %609 = vrot.lane.b32.xlu0 %v586, 112
        %v610 = vpop.permute.xlu0 %609
        %v619 = vadd.f32 %v565, %v596
        %v620 = vadd.f32 %v566, %v598
        %v621 = vadd.f32 %v567, %v600
        %v622 = vadd.f32 %v568, %v602
        %v623 = vadd.f32 %v569, %v604
        %v624 = vadd.f32 %v570, %v606
        %v625 = vadd.f32 %v571, %v608
        %v626 = vadd.f32 %v572, %v610
        %v627 = vld [vmem:[%s222 + $0x1] sm:$0xff]
        %v628 = vld [vmem:[%s222 + $0x11] sm:$0xff]
        %v629 = vld [vmem:[%s222 + $0x21] sm:$0xff]
        %v630 = vld [vmem:[%s222 + $0x31] sm:$0xff]
        %v631 = vld [vmem:[%s222 + $0x41] sm:$0xff]
        %v632 = vld [vmem:[%s222 + $0x51] sm:$0xff]
        %v633 = vld [vmem:[%s222 + $0x61] sm:$0xff]
        %v634 = vld [vmem:[%s222 + $0x71] sm:$0xff]
        %v635 = vld [vmem:[%s1 + $0x9] sm:$0x1]
        %v636 = vperm.slane %v635, 0
        %v637 = vmul.f32 %v627, %v636
        %v638 = vmul.f32 %v628, %v636
        %v639 = vmul.f32 %v629, %v636
        %v640 = vmul.f32 %v630, %v636
        %v641 = vmul.f32 %v631, %v636
        %v642 = vmul.f32 %v632, %v636
        %v643 = vmul.f32 %v633, %v636
        %v644 = vmul.f32 %v634, %v636
        %v645 = vadd.f32 %v619, %v637
        %v646 = vadd.f32 %v620, %v638
        %v647 = vadd.f32 %v621, %v639
        %v648 = vadd.f32 %v622, %v640
        %v649 = vadd.f32 %v623, %v641
        %v650 = vadd.f32 %v624, %v642
        %v651 = vadd.f32 %v625, %v643
        %v652 = vadd.f32 %v626, %v644
        %v653 = vld [vmem:[%s1 + $0xa] sm:$0x1]
        %v654 = vperm.slane %v653, 0
        %656 = vrot.lane.b32.xlu0 %v654, 8
        %v657 = vpop.permute.xlu0 %656
        %v659 = vmul.f32 %v627, %v657
        %v660 = vmul.f32 %v628, %v657
        %v661 = vmul.f32 %v629, %v657
        %v662 = vmul.f32 %v630, %v657
        %v663 = vmul.f32 %v631, %v657
        %v664 = vmul.f32 %v632, %v657
        %v665 = vmul.f32 %v633, %v657
        %v666 = vmul.f32 %v634, %v657
        %675 = vrot.lane.b32.xlu0 %v659, 120
        %v676 = vpop.permute.xlu0 %675
        %677 = vrot.lane.b32.xlu0 %v660, 120
        %v678 = vpop.permute.xlu0 %677
        %679 = vrot.lane.b32.xlu0 %v661, 120
        %v680 = vpop.permute.xlu0 %679
        %681 = vrot.lane.b32.xlu0 %v662, 120
        %v682 = vpop.permute.xlu0 %681
        %683 = vrot.lane.b32.xlu0 %v663, 120
        %v684 = vpop.permute.xlu0 %683
        %685 = vrot.lane.b32.xlu0 %v664, 120
        %v686 = vpop.permute.xlu0 %685
        %687 = vrot.lane.b32.xlu0 %v665, 120
        %v688 = vpop.permute.xlu0 %687
        %689 = vrot.lane.b32.xlu0 %v666, 120
        %v690 = vpop.permute.xlu0 %689
        %v699 = vadd.f32 %v645, %v676
        %v700 = vadd.f32 %v646, %v678
        %v701 = vadd.f32 %v647, %v680
        %v702 = vadd.f32 %v648, %v682
        %v703 = vadd.f32 %v649, %v684
        %v704 = vadd.f32 %v650, %v686
        %v705 = vadd.f32 %v651, %v688
        %v706 = vadd.f32 %v652, %v690
        %v707 = vld [vmem:[%s1 + $0xb] sm:$0x1]
        %v708 = vperm.slane %v707, 0
        %710 = vrot.lane.b32.xlu0 %v708, 16
        %v711 = vpop.permute.xlu0 %710
        %v713 = vmul.f32 %v627, %v711
        %v714 = vmul.f32 %v628, %v711
        %v715 = vmul.f32 %v629, %v711
        %v716 = vmul.f32 %v630, %v711
        %v717 = vmul.f32 %v631, %v711
        %v718 = vmul.f32 %v632, %v711
        %v719 = vmul.f32 %v633, %v711
        %v720 = vmul.f32 %v634, %v711
        %729 = vrot.lane.b32.xlu0 %v713, 112
        %v730 = vpop.permute.xlu0 %729
        %731 = vrot.lane.b32.xlu0 %v714, 112
        %v732 = vpop.permute.xlu0 %731
        %733 = vrot.lane.b32.xlu0 %v715, 112
        %v734 = vpop.permute.xlu0 %733
        %735 = vrot.lane.b32.xlu0 %v716, 112
        %v736 = vpop.permute.xlu0 %735
        %737 = vrot.lane.b32.xlu0 %v717, 112
        %v738 = vpop.permute.xlu0 %737
        %739 = vrot.lane.b32.xlu0 %v718, 112
        %v740 = vpop.permute.xlu0 %739
        %741 = vrot.lane.b32.xlu0 %v719, 112
        %v742 = vpop.permute.xlu0 %741
        %743 = vrot.lane.b32.xlu0 %v720, 112
        %v744 = vpop.permute.xlu0 %743
        %v753 = vadd.f32 %v699, %v730
        %v754 = vadd.f32 %v700, %v732
        %v755 = vadd.f32 %v701, %v734
        %v756 = vadd.f32 %v702, %v736
        %v757 = vadd.f32 %v703, %v738
        %v758 = vadd.f32 %v704, %v740
        %v759 = vadd.f32 %v705, %v742
        %v760 = vadd.f32 %v706, %v744
        %v761 = vld [vmem:[%s357 + $0x1] sm:$0xff]
        %v762 = vld [vmem:[%s357 + $0x11] sm:$0xff]
        %v763 = vld [vmem:[%s357 + $0x21] sm:$0xff]
        %v764 = vld [vmem:[%s357 + $0x31] sm:$0xff]
        %v765 = vld [vmem:[%s357 + $0x41] sm:$0xff]
        %v766 = vld [vmem:[%s357 + $0x51] sm:$0xff]
        %v767 = vld [vmem:[%s357 + $0x61] sm:$0xff]
        %v768 = vld [vmem:[%s357 + $0x71] sm:$0xff]
        %v769 = vld [vmem:[%s1 + $0xc] sm:$0x1]
        %v770 = vperm.slane %v769, 0
        %v771 = vmul.f32 %v761, %v770
        %v772 = vmul.f32 %v762, %v770
        %v773 = vmul.f32 %v763, %v770
        %v774 = vmul.f32 %v764, %v770
        %v775 = vmul.f32 %v765, %v770
        %v776 = vmul.f32 %v766, %v770
        %v777 = vmul.f32 %v767, %v770
        %v778 = vmul.f32 %v768, %v770
        %v779 = vadd.f32 %v753, %v771
        %v780 = vadd.f32 %v754, %v772
        %v781 = vadd.f32 %v755, %v773
        %v782 = vadd.f32 %v756, %v774
        %v783 = vadd.f32 %v757, %v775
        %v784 = vadd.f32 %v758, %v776
        %v785 = vadd.f32 %v759, %v777
        %v786 = vadd.f32 %v760, %v778
        %v787 = vld [vmem:[%s1 + $0xd] sm:$0x1]
        %v788 = vperm.slane %v787, 0
        %790 = vrot.lane.b32.xlu0 %v788, 8
        %v791 = vpop.permute.xlu0 %790
        %v793 = vmul.f32 %v761, %v791
        %v794 = vmul.f32 %v762, %v791
        %v795 = vmul.f32 %v763, %v791
        %v796 = vmul.f32 %v764, %v791
        %v797 = vmul.f32 %v765, %v791
        %v798 = vmul.f32 %v766, %v791
        %v799 = vmul.f32 %v767, %v791
        %v800 = vmul.f32 %v768, %v791
        %809 = vrot.lane.b32.xlu0 %v793, 120
        %v810 = vpop.permute.xlu0 %809
        %811 = vrot.lane.b32.xlu0 %v794, 120
        %v812 = vpop.permute.xlu0 %811
        %813 = vrot.lane.b32.xlu0 %v795, 120
        %v814 = vpop.permute.xlu0 %813
        %815 = vrot.lane.b32.xlu0 %v796, 120
        %v816 = vpop.permute.xlu0 %815
        %817 = vrot.lane.b32.xlu0 %v797, 120
        %v818 = vpop.permute.xlu0 %817
        %819 = vrot.lane.b32.xlu0 %v798, 120
        %v820 = vpop.permute.xlu0 %819
        %821 = vrot.lane.b32.xlu0 %v799, 120
        %v822 = vpop.permute.xlu0 %821
        %823 = vrot.lane.b32.xlu0 %v800, 120
        %v824 = vpop.permute.xlu0 %823
        %v833 = vadd.f32 %v779, %v810
        %v834 = vadd.f32 %v780, %v812
        %v835 = vadd.f32 %v781, %v814
        %v836 = vadd.f32 %v782, %v816
        %v837 = vadd.f32 %v783, %v818
        %v838 = vadd.f32 %v784, %v820
        %v839 = vadd.f32 %v785, %v822
        %v840 = vadd.f32 %v786, %v824
        %v841 = vld [vmem:[%s1 + $0xe] sm:$0x1]
        %v842 = vperm.slane %v841, 0
        %844 = vrot.lane.b32.xlu0 %v842, 16
        %v845 = vpop.permute.xlu0 %844
        %v847 = vmul.f32 %v761, %v845
        %v848 = vmul.f32 %v762, %v845
        %v849 = vmul.f32 %v763, %v845
        %v850 = vmul.f32 %v764, %v845
        %v851 = vmul.f32 %v765, %v845
        %v852 = vmul.f32 %v766, %v845
        %v853 = vmul.f32 %v767, %v845
        %v854 = vmul.f32 %v768, %v845
        %863 = vrot.lane.b32.xlu0 %v847, 112
        %v864 = vpop.permute.xlu0 %863
        %865 = vrot.lane.b32.xlu0 %v848, 112
        %v866 = vpop.permute.xlu0 %865
        %867 = vrot.lane.b32.xlu0 %v849, 112
        %v868 = vpop.permute.xlu0 %867
        %869 = vrot.lane.b32.xlu0 %v850, 112
        %v870 = vpop.permute.xlu0 %869
        %871 = vrot.lane.b32.xlu0 %v851, 112
        %v872 = vpop.permute.xlu0 %871
        %873 = vrot.lane.b32.xlu0 %v852, 112
        %v874 = vpop.permute.xlu0 %873
        %875 = vrot.lane.b32.xlu0 %v853, 112
        %v876 = vpop.permute.xlu0 %875
        %877 = vrot.lane.b32.xlu0 %v854, 112
        %v878 = vpop.permute.xlu0 %877
        %v887 = vadd.f32 %v833, %v864
        %v888 = vadd.f32 %v834, %v866
        %v889 = vadd.f32 %v835, %v868
        %v890 = vadd.f32 %v836, %v870
        %v891 = vadd.f32 %v837, %v872
        %v892 = vadd.f32 %v838, %v874
        %v893 = vadd.f32 %v839, %v876
        %v894 = vadd.f32 %v840, %v878
        %v895 = vld [vmem:[%s492 + $0x1] sm:$0xff]
        %v896 = vld [vmem:[%s492 + $0x11] sm:$0xff]
        %v897 = vld [vmem:[%s492 + $0x21] sm:$0xff]
        %v898 = vld [vmem:[%s492 + $0x31] sm:$0xff]
        %v899 = vld [vmem:[%s492 + $0x41] sm:$0xff]
        %v900 = vld [vmem:[%s492 + $0x51] sm:$0xff]
        %v901 = vld [vmem:[%s492 + $0x61] sm:$0xff]
        %v902 = vld [vmem:[%s492 + $0x71] sm:$0xff]
        %v903 = vld [vmem:[%s1 + $0xf] sm:$0x1]
        %v904 = vperm.slane %v903, 0
        %v905 = vmul.f32 %v895, %v904
        %v906 = vmul.f32 %v896, %v904
        %v907 = vmul.f32 %v897, %v904
        %v908 = vmul.f32 %v898, %v904
        %v909 = vmul.f32 %v899, %v904
        %v910 = vmul.f32 %v900, %v904
        %v911 = vmul.f32 %v901, %v904
        %v912 = vmul.f32 %v902, %v904
        %v913 = vadd.f32 %v887, %v905
        %v914 = vadd.f32 %v888, %v906
        %v915 = vadd.f32 %v889, %v907
        %v916 = vadd.f32 %v890, %v908
        %v917 = vadd.f32 %v891, %v909
        %v918 = vadd.f32 %v892, %v910
        %v919 = vadd.f32 %v893, %v911
        %v920 = vadd.f32 %v894, %v912
        %v921 = vld [vmem:[%s1 + $0x10] sm:$0x1]
        %v922 = vperm.slane %v921, 0
        %924 = vrot.lane.b32.xlu0 %v922, 8
        %v925 = vpop.permute.xlu0 %924
        %v927 = vmul.f32 %v895, %v925
        %v928 = vmul.f32 %v896, %v925
        %v929 = vmul.f32 %v897, %v925
        %v930 = vmul.f32 %v898, %v925
        %v931 = vmul.f32 %v899, %v925
        %v932 = vmul.f32 %v900, %v925
        %v933 = vmul.f32 %v901, %v925
        %v934 = vmul.f32 %v902, %v925
        %943 = vrot.lane.b32.xlu0 %v927, 120
        %v944 = vpop.permute.xlu0 %943
        %945 = vrot.lane.b32.xlu0 %v928, 120
        %v946 = vpop.permute.xlu0 %945
        %947 = vrot.lane.b32.xlu0 %v929, 120
        %v948 = vpop.permute.xlu0 %947
        %949 = vrot.lane.b32.xlu0 %v930, 120
        %v950 = vpop.permute.xlu0 %949
        %951 = vrot.lane.b32.xlu0 %v931, 120
        %v952 = vpop.permute.xlu0 %951
        %953 = vrot.lane.b32.xlu0 %v932, 120
        %v954 = vpop.permute.xlu0 %953
        %955 = vrot.lane.b32.xlu0 %v933, 120
        %v956 = vpop.permute.xlu0 %955
        %957 = vrot.lane.b32.xlu0 %v934, 120
        %v958 = vpop.permute.xlu0 %957
        %v967 = vadd.f32 %v913, %v944
        %v968 = vadd.f32 %v914, %v946
        %v969 = vadd.f32 %v915, %v948
        %v970 = vadd.f32 %v916, %v950
        %v971 = vadd.f32 %v917, %v952
        %v972 = vadd.f32 %v918, %v954
        %v973 = vadd.f32 %v919, %v956
        %v974 = vadd.f32 %v920, %v958
        %v975 = vld [vmem:[%s1 + $0x11] sm:$0x1]
        %v976 = vperm.slane %v975, 0
        %978 = vrot.lane.b32.xlu0 %v976, 16
        %v979 = vpop.permute.xlu0 %978
        %v981 = vmul.f32 %v895, %v979
        %v982 = vmul.f32 %v896, %v979
        %v983 = vmul.f32 %v897, %v979
        %v984 = vmul.f32 %v898, %v979
        %v985 = vmul.f32 %v899, %v979
        %v986 = vmul.f32 %v900, %v979
        %v987 = vmul.f32 %v901, %v979
        %v988 = vmul.f32 %v902, %v979
        %997 = vrot.lane.b32.xlu0 %v981, 112
        %v998 = vpop.permute.xlu0 %997
        %999 = vrot.lane.b32.xlu0 %v982, 112
        %v1000 = vpop.permute.xlu0 %999
        %1001 = vrot.lane.b32.xlu0 %v983, 112
        %v1002 = vpop.permute.xlu0 %1001
        %1003 = vrot.lane.b32.xlu0 %v984, 112
        %v1004 = vpop.permute.xlu0 %1003
        %1005 = vrot.lane.b32.xlu0 %v985, 112
        %v1006 = vpop.permute.xlu0 %1005
        %1007 = vrot.lane.b32.xlu0 %v986, 112
        %v1008 = vpop.permute.xlu0 %1007
        %1009 = vrot.lane.b32.xlu0 %v987, 112
        %v1010 = vpop.permute.xlu0 %1009
        %1011 = vrot.lane.b32.xlu0 %v988, 112
        %v1012 = vpop.permute.xlu0 %1011
        %v1021 = vadd.f32 %v967, %v998
        %v1022 = vadd.f32 %v968, %v1000
        %v1023 = vadd.f32 %v969, %v1002
        %v1024 = vadd.f32 %v970, %v1004
        %v1025 = vadd.f32 %v971, %v1006
        %v1026 = vadd.f32 %v972, %v1008
        %v1027 = vadd.f32 %v973, %v1010
        %v1028 = vadd.f32 %v974, %v1012
        %v1029 = vld [vmem:[%s222 + $0x2] sm:$0xff]
        %v1030 = vld [vmem:[%s222 + $0x12] sm:$0xff]
        %v1031 = vld [vmem:[%s222 + $0x22] sm:$0xff]
        %v1032 = vld [vmem:[%s222 + $0x32] sm:$0xff]
        %v1033 = vld [vmem:[%s222 + $0x42] sm:$0xff]
        %v1034 = vld [vmem:[%s222 + $0x52] sm:$0xff]
        %v1035 = vld [vmem:[%s222 + $0x62] sm:$0xff]
        %v1036 = vld [vmem:[%s222 + $0x72] sm:$0xff]
        %v1037 = vld [vmem:[%s1 + $0x12] sm:$0x1]
        %v1038 = vperm.slane %v1037, 0
        %v1039 = vmul.f32 %v1029, %v1038
        %v1040 = vmul.f32 %v1030, %v1038
        %v1041 = vmul.f32 %v1031, %v1038
        %v1042 = vmul.f32 %v1032, %v1038
        %v1043 = vmul.f32 %v1033, %v1038
        %v1044 = vmul.f32 %v1034, %v1038
        %v1045 = vmul.f32 %v1035, %v1038
        %v1046 = vmul.f32 %v1036, %v1038
        %v1047 = vadd.f32 %v1021, %v1039
        %v1048 = vadd.f32 %v1022, %v1040
        %v1049 = vadd.f32 %v1023, %v1041
        %v1050 = vadd.f32 %v1024, %v1042
        %v1051 = vadd.f32 %v1025, %v1043
        %v1052 = vadd.f32 %v1026, %v1044
        %v1053 = vadd.f32 %v1027, %v1045
        %v1054 = vadd.f32 %v1028, %v1046
        %v1055 = vld [vmem:[%s1 + $0x13] sm:$0x1]
        %v1056 = vperm.slane %v1055, 0
        %1058 = vrot.lane.b32.xlu0 %v1056, 8
        %v1059 = vpop.permute.xlu0 %1058
        %v1061 = vmul.f32 %v1029, %v1059
        %v1062 = vmul.f32 %v1030, %v1059
        %v1063 = vmul.f32 %v1031, %v1059
        %v1064 = vmul.f32 %v1032, %v1059
        %v1065 = vmul.f32 %v1033, %v1059
        %v1066 = vmul.f32 %v1034, %v1059
        %v1067 = vmul.f32 %v1035, %v1059
        %v1068 = vmul.f32 %v1036, %v1059
        %1077 = vrot.lane.b32.xlu0 %v1061, 120
        %v1078 = vpop.permute.xlu0 %1077
        %1079 = vrot.lane.b32.xlu0 %v1062, 120
        %v1080 = vpop.permute.xlu0 %1079
        %1081 = vrot.lane.b32.xlu0 %v1063, 120
        %v1082 = vpop.permute.xlu0 %1081
        %1083 = vrot.lane.b32.xlu0 %v1064, 120
        %v1084 = vpop.permute.xlu0 %1083
        %1085 = vrot.lane.b32.xlu0 %v1065, 120
        %v1086 = vpop.permute.xlu0 %1085
        %1087 = vrot.lane.b32.xlu0 %v1066, 120
        %v1088 = vpop.permute.xlu0 %1087
        %1089 = vrot.lane.b32.xlu0 %v1067, 120
        %v1090 = vpop.permute.xlu0 %1089
        %1091 = vrot.lane.b32.xlu0 %v1068, 120
        %v1092 = vpop.permute.xlu0 %1091
        %v1101 = vadd.f32 %v1047, %v1078
        %v1102 = vadd.f32 %v1048, %v1080
        %v1103 = vadd.f32 %v1049, %v1082
        %v1104 = vadd.f32 %v1050, %v1084
        %v1105 = vadd.f32 %v1051, %v1086
        %v1106 = vadd.f32 %v1052, %v1088
        %v1107 = vadd.f32 %v1053, %v1090
        %v1108 = vadd.f32 %v1054, %v1092
        %v1109 = vld [vmem:[%s1 + $0x14] sm:$0x1]
        %v1110 = vperm.slane %v1109, 0
        %1112 = vrot.lane.b32.xlu0 %v1110, 16
        %v1113 = vpop.permute.xlu0 %1112
        %v1115 = vmul.f32 %v1029, %v1113
        %v1116 = vmul.f32 %v1030, %v1113
        %v1117 = vmul.f32 %v1031, %v1113
        %v1118 = vmul.f32 %v1032, %v1113
        %v1119 = vmul.f32 %v1033, %v1113
        %v1120 = vmul.f32 %v1034, %v1113
        %v1121 = vmul.f32 %v1035, %v1113
        %v1122 = vmul.f32 %v1036, %v1113
        %1131 = vrot.lane.b32.xlu0 %v1115, 112
        %v1132 = vpop.permute.xlu0 %1131
        %1133 = vrot.lane.b32.xlu0 %v1116, 112
        %v1134 = vpop.permute.xlu0 %1133
        %1135 = vrot.lane.b32.xlu0 %v1117, 112
        %v1136 = vpop.permute.xlu0 %1135
        %1137 = vrot.lane.b32.xlu0 %v1118, 112
        %v1138 = vpop.permute.xlu0 %1137
        %1139 = vrot.lane.b32.xlu0 %v1119, 112
        %v1140 = vpop.permute.xlu0 %1139
        %1141 = vrot.lane.b32.xlu0 %v1120, 112
        %v1142 = vpop.permute.xlu0 %1141
        %1143 = vrot.lane.b32.xlu0 %v1121, 112
        %v1144 = vpop.permute.xlu0 %1143
        %1145 = vrot.lane.b32.xlu0 %v1122, 112
        %v1146 = vpop.permute.xlu0 %1145
        %v1155 = vadd.f32 %v1101, %v1132
        %v1156 = vadd.f32 %v1102, %v1134
        %v1157 = vadd.f32 %v1103, %v1136
        %v1158 = vadd.f32 %v1104, %v1138
        %v1159 = vadd.f32 %v1105, %v1140
        %v1160 = vadd.f32 %v1106, %v1142
        %v1161 = vadd.f32 %v1107, %v1144
        %v1162 = vadd.f32 %v1108, %v1146
        %v1163 = vld [vmem:[%s357 + $0x2] sm:$0xff]
        %v1164 = vld [vmem:[%s357 + $0x12] sm:$0xff]
        %v1165 = vld [vmem:[%s357 + $0x22] sm:$0xff]
        %v1166 = vld [vmem:[%s357 + $0x32] sm:$0xff]
        %v1167 = vld [vmem:[%s357 + $0x42] sm:$0xff]
        %v1168 = vld [vmem:[%s357 + $0x52] sm:$0xff]
        %v1169 = vld [vmem:[%s357 + $0x62] sm:$0xff]
        %v1170 = vld [vmem:[%s357 + $0x72] sm:$0xff]
        %v1171 = vld [vmem:[%s1 + $0x15] sm:$0x1]
        %v1172 = vperm.slane %v1171, 0
        %v1173 = vmul.f32 %v1163, %v1172
        %v1174 = vmul.f32 %v1164, %v1172
        %v1175 = vmul.f32 %v1165, %v1172
        %v1176 = vmul.f32 %v1166, %v1172
        %v1177 = vmul.f32 %v1167, %v1172
        %v1178 = vmul.f32 %v1168, %v1172
        %v1179 = vmul.f32 %v1169, %v1172
        %v1180 = vmul.f32 %v1170, %v1172
        %v1181 = vadd.f32 %v1155, %v1173
        %v1182 = vadd.f32 %v1156, %v1174
        %v1183 = vadd.f32 %v1157, %v1175
        %v1184 = vadd.f32 %v1158, %v1176
        %v1185 = vadd.f32 %v1159, %v1177
        %v1186 = vadd.f32 %v1160, %v1178
        %v1187 = vadd.f32 %v1161, %v1179
        %v1188 = vadd.f32 %v1162, %v1180
        %v1189 = vld [vmem:[%s1 + $0x16] sm:$0x1]
        %v1190 = vperm.slane %v1189, 0
        %1192 = vrot.lane.b32.xlu0 %v1190, 8
        %v1193 = vpop.permute.xlu0 %1192
        %v1195 = vmul.f32 %v1163, %v1193
        %v1196 = vmul.f32 %v1164, %v1193
        %v1197 = vmul.f32 %v1165, %v1193
        %v1198 = vmul.f32 %v1166, %v1193
        %v1199 = vmul.f32 %v1167, %v1193
        %v1200 = vmul.f32 %v1168, %v1193
        %v1201 = vmul.f32 %v1169, %v1193
        %v1202 = vmul.f32 %v1170, %v1193
        %1211 = vrot.lane.b32.xlu0 %v1195, 120
        %v1212 = vpop.permute.xlu0 %1211
        %1213 = vrot.lane.b32.xlu0 %v1196, 120
        %v1214 = vpop.permute.xlu0 %1213
        %1215 = vrot.lane.b32.xlu0 %v1197, 120
        %v1216 = vpop.permute.xlu0 %1215
        %1217 = vrot.lane.b32.xlu0 %v1198, 120
        %v1218 = vpop.permute.xlu0 %1217
        %1219 = vrot.lane.b32.xlu0 %v1199, 120
        %v1220 = vpop.permute.xlu0 %1219
        %1221 = vrot.lane.b32.xlu0 %v1200, 120
        %v1222 = vpop.permute.xlu0 %1221
        %1223 = vrot.lane.b32.xlu0 %v1201, 120
        %v1224 = vpop.permute.xlu0 %1223
        %1225 = vrot.lane.b32.xlu0 %v1202, 120
        %v1226 = vpop.permute.xlu0 %1225
        %v1235 = vadd.f32 %v1181, %v1212
        %v1236 = vadd.f32 %v1182, %v1214
        %v1237 = vadd.f32 %v1183, %v1216
        %v1238 = vadd.f32 %v1184, %v1218
        %v1239 = vadd.f32 %v1185, %v1220
        %v1240 = vadd.f32 %v1186, %v1222
        %v1241 = vadd.f32 %v1187, %v1224
        %v1242 = vadd.f32 %v1188, %v1226
        %v1243 = vld [vmem:[%s1 + $0x17] sm:$0x1]
        %v1244 = vperm.slane %v1243, 0
        %1246 = vrot.lane.b32.xlu0 %v1244, 16
        %v1247 = vpop.permute.xlu0 %1246
        %v1249 = vmul.f32 %v1163, %v1247
        %v1250 = vmul.f32 %v1164, %v1247
        %v1251 = vmul.f32 %v1165, %v1247
        %v1252 = vmul.f32 %v1166, %v1247
        %v1253 = vmul.f32 %v1167, %v1247
        %v1254 = vmul.f32 %v1168, %v1247
        %v1255 = vmul.f32 %v1169, %v1247
        %v1256 = vmul.f32 %v1170, %v1247
        %1265 = vrot.lane.b32.xlu0 %v1249, 112
        %v1266 = vpop.permute.xlu0 %1265
        %1267 = vrot.lane.b32.xlu0 %v1250, 112
        %v1268 = vpop.permute.xlu0 %1267
        %1269 = vrot.lane.b32.xlu0 %v1251, 112
        %v1270 = vpop.permute.xlu0 %1269
        %1271 = vrot.lane.b32.xlu0 %v1252, 112
        %v1272 = vpop.permute.xlu0 %1271
        %1273 = vrot.lane.b32.xlu0 %v1253, 112
        %v1274 = vpop.permute.xlu0 %1273
        %1275 = vrot.lane.b32.xlu0 %v1254, 112
        %v1276 = vpop.permute.xlu0 %1275
        %1277 = vrot.lane.b32.xlu0 %v1255, 112
        %v1278 = vpop.permute.xlu0 %1277
        %1279 = vrot.lane.b32.xlu0 %v1256, 112
        %v1280 = vpop.permute.xlu0 %1279
        %v1289 = vadd.f32 %v1235, %v1266
        %v1290 = vadd.f32 %v1236, %v1268
        %v1291 = vadd.f32 %v1237, %v1270
        %v1292 = vadd.f32 %v1238, %v1272
        %v1293 = vadd.f32 %v1239, %v1274
        %v1294 = vadd.f32 %v1240, %v1276
        %v1295 = vadd.f32 %v1241, %v1278
        %v1296 = vadd.f32 %v1242, %v1280
        %v1297 = vld [vmem:[%s492 + $0x2] sm:$0xff]
        %v1298 = vld [vmem:[%s492 + $0x12] sm:$0xff]
        %v1299 = vld [vmem:[%s492 + $0x22] sm:$0xff]
        %v1300 = vld [vmem:[%s492 + $0x32] sm:$0xff]
        %v1301 = vld [vmem:[%s492 + $0x42] sm:$0xff]
        %v1302 = vld [vmem:[%s492 + $0x52] sm:$0xff]
        %v1303 = vld [vmem:[%s492 + $0x62] sm:$0xff]
        %v1304 = vld [vmem:[%s492 + $0x72] sm:$0xff]
        %v1305 = vld [vmem:[%s1 + $0x18] sm:$0x1]
        %v1306 = vperm.slane %v1305, 0
        %v1307 = vmul.f32 %v1297, %v1306
        %v1308 = vmul.f32 %v1298, %v1306
        %v1309 = vmul.f32 %v1299, %v1306
        %v1310 = vmul.f32 %v1300, %v1306
        %v1311 = vmul.f32 %v1301, %v1306
        %v1312 = vmul.f32 %v1302, %v1306
        %v1313 = vmul.f32 %v1303, %v1306
        %v1314 = vmul.f32 %v1304, %v1306
        %v1315 = vadd.f32 %v1289, %v1307
        %v1316 = vadd.f32 %v1290, %v1308
        %v1317 = vadd.f32 %v1291, %v1309
        %v1318 = vadd.f32 %v1292, %v1310
        %v1319 = vadd.f32 %v1293, %v1311
        %v1320 = vadd.f32 %v1294, %v1312
        %v1321 = vadd.f32 %v1295, %v1313
        %v1322 = vadd.f32 %v1296, %v1314
        %v1323 = vld [vmem:[%s1 + $0x19] sm:$0x1]
        %v1324 = vperm.slane %v1323, 0
        %1326 = vrot.lane.b32.xlu0 %v1324, 8
        %v1327 = vpop.permute.xlu0 %1326
        %v1329 = vmul.f32 %v1297, %v1327
        %v1330 = vmul.f32 %v1298, %v1327
        %v1331 = vmul.f32 %v1299, %v1327
        %v1332 = vmul.f32 %v1300, %v1327
        %v1333 = vmul.f32 %v1301, %v1327
        %v1334 = vmul.f32 %v1302, %v1327
        %v1335 = vmul.f32 %v1303, %v1327
        %v1336 = vmul.f32 %v1304, %v1327
        %1345 = vrot.lane.b32.xlu0 %v1329, 120
        %v1346 = vpop.permute.xlu0 %1345
        %1347 = vrot.lane.b32.xlu0 %v1330, 120
        %v1348 = vpop.permute.xlu0 %1347
        %1349 = vrot.lane.b32.xlu0 %v1331, 120
        %v1350 = vpop.permute.xlu0 %1349
        %1351 = vrot.lane.b32.xlu0 %v1332, 120
        %v1352 = vpop.permute.xlu0 %1351
        %1353 = vrot.lane.b32.xlu0 %v1333, 120
        %v1354 = vpop.permute.xlu0 %1353
        %1355 = vrot.lane.b32.xlu0 %v1334, 120
        %v1356 = vpop.permute.xlu0 %1355
        %1357 = vrot.lane.b32.xlu0 %v1335, 120
        %v1358 = vpop.permute.xlu0 %1357
        %1359 = vrot.lane.b32.xlu0 %v1336, 120
        %v1360 = vpop.permute.xlu0 %1359
        %v1369 = vadd.f32 %v1315, %v1346
        %v1370 = vadd.f32 %v1316, %v1348
        %v1371 = vadd.f32 %v1317, %v1350
        %v1372 = vadd.f32 %v1318, %v1352
        %v1373 = vadd.f32 %v1319, %v1354
        %v1374 = vadd.f32 %v1320, %v1356
        %v1375 = vadd.f32 %v1321, %v1358
        %v1376 = vadd.f32 %v1322, %v1360
        %v1377 = vld [vmem:[%s1 + $0x1a] sm:$0x1]
        %v1378 = vperm.slane %v1377, 0
        %1380 = vrot.lane.b32.xlu0 %v1378, 16
        %v1381 = vpop.permute.xlu0 %1380
        %v1383 = vmul.f32 %v1297, %v1381
        %v1384 = vmul.f32 %v1298, %v1381
        %v1385 = vmul.f32 %v1299, %v1381
        %v1386 = vmul.f32 %v1300, %v1381
        %v1387 = vmul.f32 %v1301, %v1381
        %v1388 = vmul.f32 %v1302, %v1381
        %v1389 = vmul.f32 %v1303, %v1381
        %v1390 = vmul.f32 %v1304, %v1381
        %1399 = vrot.lane.b32.xlu0 %v1383, 112
        %v1400 = vpop.permute.xlu0 %1399
        %1401 = vrot.lane.b32.xlu0 %v1384, 112
        %v1402 = vpop.permute.xlu0 %1401
        %1403 = vrot.lane.b32.xlu0 %v1385, 112
        %v1404 = vpop.permute.xlu0 %1403
        %1405 = vrot.lane.b32.xlu0 %v1386, 112
        %v1406 = vpop.permute.xlu0 %1405
        %1407 = vrot.lane.b32.xlu0 %v1387, 112
        %v1408 = vpop.permute.xlu0 %1407
        %1409 = vrot.lane.b32.xlu0 %v1388, 112
        %v1410 = vpop.permute.xlu0 %1409
        %1411 = vrot.lane.b32.xlu0 %v1389, 112
        %v1412 = vpop.permute.xlu0 %1411
        %1413 = vrot.lane.b32.xlu0 %v1390, 112
        %v1414 = vpop.permute.xlu0 %1413
        %v1423 = vadd.f32 %v1369, %v1400
        %v1424 = vadd.f32 %v1370, %v1402
        %v1425 = vadd.f32 %v1371, %v1404
        %v1426 = vadd.f32 %v1372, %v1406
        %v1427 = vadd.f32 %v1373, %v1408
        %v1428 = vadd.f32 %v1374, %v1410
        %v1429 = vadd.f32 %v1375, %v1412
        %v1430 = vadd.f32 %v1376, %v1414
        %v1431 = vld [vmem:[%s2] sm:$0x1]
        %v1433 = vperm.slane %v1431, 0
        %v1435 = vadd.f32 %v1423, %v1433
        %v1436 = vadd.f32 %v1424, %v1433
        %v1437 = vadd.f32 %v1425, %v1433
        %v1438 = vadd.f32 %v1426, %v1433
        %v1439 = vadd.f32 %v1427, %v1433
        %v1440 = vadd.f32 %v1428, %v1433
        %v1441 = vadd.f32 %v1429, %v1433
        %v1442 = vadd.f32 %v1430, %v1433
        %1451 = vrot.lane.b32.xlu0 %v1435, 125
        %v1452 = vpop.permute.xlu0 %1451
        %1453 = vrot.lane.b32.xlu0 %v1436, 125
        %v1454 = vpop.permute.xlu0 %1453
        %1455 = vrot.lane.b32.xlu0 %v1437, 125
        %v1456 = vpop.permute.xlu0 %1455
        %1457 = vrot.lane.b32.xlu0 %v1438, 125
        %v1458 = vpop.permute.xlu0 %1457
        %1459 = vrot.lane.b32.xlu0 %v1439, 125
        %v1460 = vpop.permute.xlu0 %1459
        %1461 = vrot.lane.b32.xlu0 %v1440, 125
        %v1462 = vpop.permute.xlu0 %1461
        %1463 = vrot.lane.b32.xlu0 %v1441, 125
        %v1464 = vpop.permute.xlu0 %1463
        %1465 = vrot.lane.b32.xlu0 %v1442, 125
        %v1466 = vpop.permute.xlu0 %1465
        %1475 = vrot.lane.b32.xlu0 %v1435, 61
        %v1476 = vpop.permute.xlu0 %1475
        %1477 = vrot.lane.b32.xlu0 %v1436, 61
        %v1478 = vpop.permute.xlu0 %1477
        %1479 = vrot.lane.b32.xlu0 %v1437, 61
        %v1480 = vpop.permute.xlu0 %1479
        %1481 = vrot.lane.b32.xlu0 %v1438, 61
        %v1482 = vpop.permute.xlu0 %1481
        %1483 = vrot.lane.b32.xlu0 %v1439, 61
        %v1484 = vpop.permute.xlu0 %1483
        %1485 = vrot.lane.b32.xlu0 %v1440, 61
        %v1486 = vpop.permute.xlu0 %1485
        %1487 = vrot.lane.b32.xlu0 %v1441, 61
        %v1488 = vpop.permute.xlu0 %1487
        %1489 = vrot.lane.b32.xlu0 %v1442, 61
        %v1490 = vpop.permute.xlu0 %1489
        %vm1499 = vcmask 498688
        %v1500 = vsel %vm1499, %v1452, %v1476
        %v1501 = vsel %vm1499, %v1454, %v1478
        %v1502 = vsel %vm1499, %v1456, %v1480
        %v1503 = vsel %vm1499, %v1458, %v1482
        %v1504 = vsel %vm1499, %v1460, %v1484
        %v1505 = vsel %vm1499, %v1462, %v1486
        %v1506 = vsel %vm1499, %v1464, %v1488
        %v1507 = vsel %vm1499, %v1466, %v1490
        %v1508 = vld [vmem:[%s3] sm:$0x1]
        %v1509 = vperm.slane %v1508, 0
        %v1510 = vmul.f32 %v1500, %v1509
        %v1511 = vmul.f32 %v1501, %v1509
        %v1512 = vmul.f32 %v1502, %v1509
        %v1513 = vmul.f32 %v1503, %v1509
        %v1514 = vmul.f32 %v1504, %v1509
        %v1515 = vmul.f32 %v1505, %v1509
        %v1516 = vmul.f32 %v1506, %v1509
        %v1517 = vmul.f32 %v1507, %v1509
        %v1518 = vadd.f32 %v1510, 0.0
        %v1519 = vadd.f32 %v1511, 0.0
        %v1520 = vadd.f32 %v1512, 0.0
        %v1521 = vadd.f32 %v1513, 0.0
        %v1522 = vadd.f32 %v1514, 0.0
        %v1523 = vadd.f32 %v1515, 0.0
        %v1524 = vadd.f32 %v1516, 0.0
        %v1525 = vadd.f32 %v1517, 0.0
        %1526 = vrot.lane.b32.xlu0 %v1435, 126
        %v1527 = vpop.permute.xlu0 %1526
        %1528 = vrot.lane.b32.xlu0 %v1436, 126
        %v1529 = vpop.permute.xlu0 %1528
        %1530 = vrot.lane.b32.xlu0 %v1437, 126
        %v1531 = vpop.permute.xlu0 %1530
        %1532 = vrot.lane.b32.xlu0 %v1438, 126
        %v1533 = vpop.permute.xlu0 %1532
        %1534 = vrot.lane.b32.xlu0 %v1439, 126
        %v1535 = vpop.permute.xlu0 %1534
        %1536 = vrot.lane.b32.xlu0 %v1440, 126
        %v1537 = vpop.permute.xlu0 %1536
        %1538 = vrot.lane.b32.xlu0 %v1441, 126
        %v1539 = vpop.permute.xlu0 %1538
        %1540 = vrot.lane.b32.xlu0 %v1442, 126
        %v1541 = vpop.permute.xlu0 %1540
        %1550 = vrot.lane.b32.xlu0 %v1435, 62
        %v1551 = vpop.permute.xlu0 %1550
        %1552 = vrot.lane.b32.xlu0 %v1436, 62
        %v1553 = vpop.permute.xlu0 %1552
        %1554 = vrot.lane.b32.xlu0 %v1437, 62
        %v1555 = vpop.permute.xlu0 %1554
        %1556 = vrot.lane.b32.xlu0 %v1438, 62
        %v1557 = vpop.permute.xlu0 %1556
        %1558 = vrot.lane.b32.xlu0 %v1439, 62
        %v1559 = vpop.permute.xlu0 %1558
        %1560 = vrot.lane.b32.xlu0 %v1440, 62
        %v1561 = vpop.permute.xlu0 %1560
        %1562 = vrot.lane.b32.xlu0 %v1441, 62
        %v1563 = vpop.permute.xlu0 %1562
        %1564 = vrot.lane.b32.xlu0 %v1442, 62
        %v1565 = vpop.permute.xlu0 %1564
        %vm1574 = vcmask 506880
        %v1575 = vsel %vm1574, %v1527, %v1551
        %v1576 = vsel %vm1574, %v1529, %v1553
        %v1577 = vsel %vm1574, %v1531, %v1555
        %v1578 = vsel %vm1574, %v1533, %v1557
        %v1579 = vsel %vm1574, %v1535, %v1559
        %v1580 = vsel %vm1574, %v1537, %v1561
        %v1581 = vsel %vm1574, %v1539, %v1563
        %v1582 = vsel %vm1574, %v1541, %v1565
        %v1583 = vld [vmem:[%s3 + $0x1] sm:$0x1]
        %v1584 = vperm.slane %v1583, 0
        %v1585 = vmul.f32 %v1575, %v1584
        %v1586 = vmul.f32 %v1576, %v1584
        %v1587 = vmul.f32 %v1577, %v1584
        %v1588 = vmul.f32 %v1578, %v1584
        %v1589 = vmul.f32 %v1579, %v1584
        %v1590 = vmul.f32 %v1580, %v1584
        %v1591 = vmul.f32 %v1581, %v1584
        %v1592 = vmul.f32 %v1582, %v1584
        %v1593 = vadd.f32 %v1518, %v1585
        %v1594 = vadd.f32 %v1519, %v1586
        %v1595 = vadd.f32 %v1520, %v1587
        %v1596 = vadd.f32 %v1521, %v1588
        %v1597 = vadd.f32 %v1522, %v1589
        %v1598 = vadd.f32 %v1523, %v1590
        %v1599 = vadd.f32 %v1524, %v1591
        %v1600 = vadd.f32 %v1525, %v1592
        %1601 = vrot.lane.b32.xlu0 %v1435, 127
        %v1602 = vpop.permute.xlu0 %1601
        %1603 = vrot.lane.b32.xlu0 %v1436, 127
        %v1604 = vpop.permute.xlu0 %1603
        %1605 = vrot.lane.b32.xlu0 %v1437, 127
        %v1606 = vpop.permute.xlu0 %1605
        %1607 = vrot.lane.b32.xlu0 %v1438, 127
        %v1608 = vpop.permute.xlu0 %1607
        %1609 = vrot.lane.b32.xlu0 %v1439, 127
        %v1610 = vpop.permute.xlu0 %1609
        %1611 = vrot.lane.b32.xlu0 %v1440, 127
        %v1612 = vpop.permute.xlu0 %1611
        %1613 = vrot.lane.b32.xlu0 %v1441, 127
        %v1614 = vpop.permute.xlu0 %1613
        %1615 = vrot.lane.b32.xlu0 %v1442, 127
        %v1616 = vpop.permute.xlu0 %1615
        %1625 = vrot.lane.b32.xlu0 %v1435, 63
        %v1626 = vpop.permute.xlu0 %1625
        %1627 = vrot.lane.b32.xlu0 %v1436, 63
        %v1628 = vpop.permute.xlu0 %1627
        %1629 = vrot.lane.b32.xlu0 %v1437, 63
        %v1630 = vpop.permute.xlu0 %1629
        %1631 = vrot.lane.b32.xlu0 %v1438, 63
        %v1632 = vpop.permute.xlu0 %1631
        %1633 = vrot.lane.b32.xlu0 %v1439, 63
        %v1634 = vpop.permute.xlu0 %1633
        %1635 = vrot.lane.b32.xlu0 %v1440, 63
        %v1636 = vpop.permute.xlu0 %1635
        %1637 = vrot.lane.b32.xlu0 %v1441, 63
        %v1638 = vpop.permute.xlu0 %1637
        %1639 = vrot.lane.b32.xlu0 %v1442, 63
        %v1640 = vpop.permute.xlu0 %1639
        %vm1649 = vcmask 515072
        %v1650 = vsel %vm1649, %v1602, %v1626
        %v1651 = vsel %vm1649, %v1604, %v1628
        %v1652 = vsel %vm1649, %v1606, %v1630
        %v1653 = vsel %vm1649, %v1608, %v1632
        %v1654 = vsel %vm1649, %v1610, %v1634
        %v1655 = vsel %vm1649, %v1612, %v1636
        %v1656 = vsel %vm1649, %v1614, %v1638
        %v1657 = vsel %vm1649, %v1616, %v1640
        %v1658 = vld [vmem:[%s3 + $0x2] sm:$0x1]
        %v1659 = vperm.slane %v1658, 0
        %v1660 = vmul.f32 %v1650, %v1659
        %v1661 = vmul.f32 %v1651, %v1659
        %v1662 = vmul.f32 %v1652, %v1659
        %v1663 = vmul.f32 %v1653, %v1659
        %v1664 = vmul.f32 %v1654, %v1659
        %v1665 = vmul.f32 %v1655, %v1659
        %v1666 = vmul.f32 %v1656, %v1659
        %v1667 = vmul.f32 %v1657, %v1659
        %v1668 = vadd.f32 %v1593, %v1660
        %v1669 = vadd.f32 %v1594, %v1661
        %v1670 = vadd.f32 %v1595, %v1662
        %v1671 = vadd.f32 %v1596, %v1663
        %v1672 = vadd.f32 %v1597, %v1664
        %v1673 = vadd.f32 %v1598, %v1665
        %v1674 = vadd.f32 %v1599, %v1666
        %v1675 = vadd.f32 %v1600, %v1667
        %v1676 = vld [vmem:[%s3 + $0x3] sm:$0x1]
        %v1677 = vperm.slane %v1676, 0
        %v1678 = vmul.f32 %v1435, %v1677
        %v1679 = vmul.f32 %v1436, %v1677
        %v1680 = vmul.f32 %v1437, %v1677
        %v1681 = vmul.f32 %v1438, %v1677
        %v1682 = vmul.f32 %v1439, %v1677
        %v1683 = vmul.f32 %v1440, %v1677
        %v1684 = vmul.f32 %v1441, %v1677
        %v1685 = vmul.f32 %v1442, %v1677
        %v1686 = vadd.f32 %v1668, %v1678
        %v1687 = vadd.f32 %v1669, %v1679
        %v1688 = vadd.f32 %v1670, %v1680
        %v1689 = vadd.f32 %v1671, %v1681
        %v1690 = vadd.f32 %v1672, %v1682
        %v1691 = vadd.f32 %v1673, %v1683
        %v1692 = vadd.f32 %v1674, %v1684
        %v1693 = vadd.f32 %v1675, %v1685
        %1694 = vrot.lane.b32.xlu0 %v1435, 65
        %v1695 = vpop.permute.xlu0 %1694
        %1696 = vrot.lane.b32.xlu0 %v1436, 65
        %v1697 = vpop.permute.xlu0 %1696
        %1698 = vrot.lane.b32.xlu0 %v1437, 65
        %v1699 = vpop.permute.xlu0 %1698
        %1700 = vrot.lane.b32.xlu0 %v1438, 65
        %v1701 = vpop.permute.xlu0 %1700
        %1702 = vrot.lane.b32.xlu0 %v1439, 65
        %v1703 = vpop.permute.xlu0 %1702
        %1704 = vrot.lane.b32.xlu0 %v1440, 65
        %v1705 = vpop.permute.xlu0 %1704
        %1706 = vrot.lane.b32.xlu0 %v1441, 65
        %v1707 = vpop.permute.xlu0 %1706
        %1708 = vrot.lane.b32.xlu0 %v1442, 65
        %v1709 = vpop.permute.xlu0 %1708
        %1718 = vrot.lane.b32.xlu0 %v1435, 1
        %v1719 = vpop.permute.xlu0 %1718
        %1720 = vrot.lane.b32.xlu0 %v1436, 1
        %v1721 = vpop.permute.xlu0 %1720
        %1722 = vrot.lane.b32.xlu0 %v1437, 1
        %v1723 = vpop.permute.xlu0 %1722
        %1724 = vrot.lane.b32.xlu0 %v1438, 1
        %v1725 = vpop.permute.xlu0 %1724
        %1726 = vrot.lane.b32.xlu0 %v1439, 1
        %v1727 = vpop.permute.xlu0 %1726
        %1728 = vrot.lane.b32.xlu0 %v1440, 1
        %v1729 = vpop.permute.xlu0 %1728
        %1730 = vrot.lane.b32.xlu0 %v1441, 1
        %v1731 = vpop.permute.xlu0 %1730
        %1732 = vrot.lane.b32.xlu0 %v1442, 1
        %v1733 = vpop.permute.xlu0 %1732
        %vm1742 = vcmask 7168
        %v1743 = vsel %vm1742, %v1695, %v1719
        %v1744 = vsel %vm1742, %v1697, %v1721
        %v1745 = vsel %vm1742, %v1699, %v1723
        %v1746 = vsel %vm1742, %v1701, %v1725
        %v1747 = vsel %vm1742, %v1703, %v1727
        %v1748 = vsel %vm1742, %v1705, %v1729
        %v1749 = vsel %vm1742, %v1707, %v1731
        %v1750 = vsel %vm1742, %v1709, %v1733
        %v1751 = vld [vmem:[%s3 + $0x4] sm:$0x1]
        %v1752 = vperm.slane %v1751, 0
        %v1753 = vmul.f32 %v1743, %v1752
        %v1754 = vmul.f32 %v1744, %v1752
        %v1755 = vmul.f32 %v1745, %v1752
        %v1756 = vmul.f32 %v1746, %v1752
        %v1757 = vmul.f32 %v1747, %v1752
        %v1758 = vmul.f32 %v1748, %v1752
        %v1759 = vmul.f32 %v1749, %v1752
        %v1760 = vmul.f32 %v1750, %v1752
        %v1761 = vadd.f32 %v1686, %v1753
        %v1762 = vadd.f32 %v1687, %v1754
        %v1763 = vadd.f32 %v1688, %v1755
        %v1764 = vadd.f32 %v1689, %v1756
        %v1765 = vadd.f32 %v1690, %v1757
        %v1766 = vadd.f32 %v1691, %v1758
        %v1767 = vadd.f32 %v1692, %v1759
        %v1768 = vadd.f32 %v1693, %v1760
        %1769 = vrot.lane.b32.xlu0 %v1435, 66
        %v1770 = vpop.permute.xlu0 %1769
        %1771 = vrot.lane.b32.xlu0 %v1436, 66
        %v1772 = vpop.permute.xlu0 %1771
        %1773 = vrot.lane.b32.xlu0 %v1437, 66
        %v1774 = vpop.permute.xlu0 %1773
        %1775 = vrot.lane.b32.xlu0 %v1438, 66
        %v1776 = vpop.permute.xlu0 %1775
        %1777 = vrot.lane.b32.xlu0 %v1439, 66
        %v1778 = vpop.permute.xlu0 %1777
        %1779 = vrot.lane.b32.xlu0 %v1440, 66
        %v1780 = vpop.permute.xlu0 %1779
        %1781 = vrot.lane.b32.xlu0 %v1441, 66
        %v1782 = vpop.permute.xlu0 %1781
        %1783 = vrot.lane.b32.xlu0 %v1442, 66
        %v1784 = vpop.permute.xlu0 %1783
        %1793 = vrot.lane.b32.xlu0 %v1435, 2
        %v1794 = vpop.permute.xlu0 %1793
        %1795 = vrot.lane.b32.xlu0 %v1436, 2
        %v1796 = vpop.permute.xlu0 %1795
        %1797 = vrot.lane.b32.xlu0 %v1437, 2
        %v1798 = vpop.permute.xlu0 %1797
        %1799 = vrot.lane.b32.xlu0 %v1438, 2
        %v1800 = vpop.permute.xlu0 %1799
        %1801 = vrot.lane.b32.xlu0 %v1439, 2
        %v1802 = vpop.permute.xlu0 %1801
        %1803 = vrot.lane.b32.xlu0 %v1440, 2
        %v1804 = vpop.permute.xlu0 %1803
        %1805 = vrot.lane.b32.xlu0 %v1441, 2
        %v1806 = vpop.permute.xlu0 %1805
        %1807 = vrot.lane.b32.xlu0 %v1442, 2
        %v1808 = vpop.permute.xlu0 %1807
        %vm1817 = vcmask 15360
        %v1818 = vsel %vm1817, %v1770, %v1794
        %v1819 = vsel %vm1817, %v1772, %v1796
        %v1820 = vsel %vm1817, %v1774, %v1798
        %v1821 = vsel %vm1817, %v1776, %v1800
        %v1822 = vsel %vm1817, %v1778, %v1802
        %v1823 = vsel %vm1817, %v1780, %v1804
        %v1824 = vsel %vm1817, %v1782, %v1806
        %v1825 = vsel %vm1817, %v1784, %v1808
        %v1826 = vld [vmem:[%s3 + $0x5] sm:$0x1]
        %v1827 = vperm.slane %v1826, 0
        %v1828 = vmul.f32 %v1818, %v1827
        %v1829 = vmul.f32 %v1819, %v1827
        %v1830 = vmul.f32 %v1820, %v1827
        %v1831 = vmul.f32 %v1821, %v1827
        %v1832 = vmul.f32 %v1822, %v1827
        %v1833 = vmul.f32 %v1823, %v1827
        %v1834 = vmul.f32 %v1824, %v1827
        %v1835 = vmul.f32 %v1825, %v1827
        %v1836 = vadd.f32 %v1761, %v1828
        %v1837 = vadd.f32 %v1762, %v1829
        %v1838 = vadd.f32 %v1763, %v1830
        %v1839 = vadd.f32 %v1764, %v1831
        %v1840 = vadd.f32 %v1765, %v1832
        %v1841 = vadd.f32 %v1766, %v1833
        %v1842 = vadd.f32 %v1767, %v1834
        %v1843 = vadd.f32 %v1768, %v1835
        %1844 = vrot.lane.b32.xlu0 %v1435, 67
        %v1845 = vpop.permute.xlu0 %1844
        %1846 = vrot.lane.b32.xlu0 %v1436, 67
        %v1847 = vpop.permute.xlu0 %1846
        %1848 = vrot.lane.b32.xlu0 %v1437, 67
        %v1849 = vpop.permute.xlu0 %1848
        %1850 = vrot.lane.b32.xlu0 %v1438, 67
        %v1851 = vpop.permute.xlu0 %1850
        %1852 = vrot.lane.b32.xlu0 %v1439, 67
        %v1853 = vpop.permute.xlu0 %1852
        %1854 = vrot.lane.b32.xlu0 %v1440, 67
        %v1855 = vpop.permute.xlu0 %1854
        %1856 = vrot.lane.b32.xlu0 %v1441, 67
        %v1857 = vpop.permute.xlu0 %1856
        %1858 = vrot.lane.b32.xlu0 %v1442, 67
        %v1859 = vpop.permute.xlu0 %1858
        %1868 = vrot.lane.b32.xlu0 %v1435, 3
        %v1869 = vpop.permute.xlu0 %1868
        %1870 = vrot.lane.b32.xlu0 %v1436, 3
        %v1871 = vpop.permute.xlu0 %1870
        %1872 = vrot.lane.b32.xlu0 %v1437, 3
        %v1873 = vpop.permute.xlu0 %1872
        %1874 = vrot.lane.b32.xlu0 %v1438, 3
        %v1875 = vpop.permute.xlu0 %1874
        %1876 = vrot.lane.b32.xlu0 %v1439, 3
        %v1877 = vpop.permute.xlu0 %1876
        %1878 = vrot.lane.b32.xlu0 %v1440, 3
        %v1879 = vpop.permute.xlu0 %1878
        %1880 = vrot.lane.b32.xlu0 %v1441, 3
        %v1881 = vpop.permute.xlu0 %1880
        %1882 = vrot.lane.b32.xlu0 %v1442, 3
        %v1883 = vpop.permute.xlu0 %1882
        %vm1892 = vcmask 23552
        %v1893 = vsel %vm1892, %v1845, %v1869
        %v1894 = vsel %vm1892, %v1847, %v1871
        %v1895 = vsel %vm1892, %v1849, %v1873
        %v1896 = vsel %vm1892, %v1851, %v1875
        %v1897 = vsel %vm1892, %v1853, %v1877
        %v1898 = vsel %vm1892, %v1855, %v1879
        %v1899 = vsel %vm1892, %v1857, %v1881
        %v1900 = vsel %vm1892, %v1859, %v1883
        %v1901 = vld [vmem:[%s3 + $0x6] sm:$0x1]
        %v1902 = vperm.slane %v1901, 0
        %v1903 = vmul.f32 %v1893, %v1902
        %v1904 = vmul.f32 %v1894, %v1902
        %v1905 = vmul.f32 %v1895, %v1902
        %v1906 = vmul.f32 %v1896, %v1902
        %v1907 = vmul.f32 %v1897, %v1902
        %v1908 = vmul.f32 %v1898, %v1902
        %v1909 = vmul.f32 %v1899, %v1902
        %v1910 = vmul.f32 %v1900, %v1902
        %v1911 = vadd.f32 %v1836, %v1903
        %v1912 = vadd.f32 %v1837, %v1904
        %v1913 = vadd.f32 %v1838, %v1905
        %v1914 = vadd.f32 %v1839, %v1906
        %v1915 = vadd.f32 %v1840, %v1907
        %v1916 = vadd.f32 %v1841, %v1908
        %v1917 = vadd.f32 %v1842, %v1909
        %v1918 = vadd.f32 %v1843, %v1910
        %1919 = vrot.lane.b32.xlu0 %v1435, 68
        %v1920 = vpop.permute.xlu0 %1919
        %1921 = vrot.lane.b32.xlu0 %v1436, 68
        %v1922 = vpop.permute.xlu0 %1921
        %1923 = vrot.lane.b32.xlu0 %v1437, 68
        %v1924 = vpop.permute.xlu0 %1923
        %1925 = vrot.lane.b32.xlu0 %v1438, 68
        %v1926 = vpop.permute.xlu0 %1925
        %1927 = vrot.lane.b32.xlu0 %v1439, 68
        %v1928 = vpop.permute.xlu0 %1927
        %1929 = vrot.lane.b32.xlu0 %v1440, 68
        %v1930 = vpop.permute.xlu0 %1929
        %1931 = vrot.lane.b32.xlu0 %v1441, 68
        %v1932 = vpop.permute.xlu0 %1931
        %1933 = vrot.lane.b32.xlu0 %v1442, 68
        %v1934 = vpop.permute.xlu0 %1933
        %1943 = vrot.lane.b32.xlu0 %v1435, 4
        %v1944 = vpop.permute.xlu0 %1943
        %1945 = vrot.lane.b32.xlu0 %v1436, 4
        %v1946 = vpop.permute.xlu0 %1945
        %1947 = vrot.lane.b32.xlu0 %v1437, 4
        %v1948 = vpop.permute.xlu0 %1947
        %1949 = vrot.lane.b32.xlu0 %v1438, 4
        %v1950 = vpop.permute.xlu0 %1949
        %1951 = vrot.lane.b32.xlu0 %v1439, 4
        %v1952 = vpop.permute.xlu0 %1951
        %1953 = vrot.lane.b32.xlu0 %v1440, 4
        %v1954 = vpop.permute.xlu0 %1953
        %1955 = vrot.lane.b32.xlu0 %v1441, 4
        %v1956 = vpop.permute.xlu0 %1955
        %1957 = vrot.lane.b32.xlu0 %v1442, 4
        %v1958 = vpop.permute.xlu0 %1957
        %vm1967 = vcmask 31744
        %v1968 = vsel %vm1967, %v1920, %v1944
        %v1969 = vsel %vm1967, %v1922, %v1946
        %v1970 = vsel %vm1967, %v1924, %v1948
        %v1971 = vsel %vm1967, %v1926, %v1950
        %v1972 = vsel %vm1967, %v1928, %v1952
        %v1973 = vsel %vm1967, %v1930, %v1954
        %v1974 = vsel %vm1967, %v1932, %v1956
        %v1975 = vsel %vm1967, %v1934, %v1958
        %v1976 = vld [vmem:[%s3 + $0x7] sm:$0x1]
        %v1977 = vperm.slane %v1976, 0
        %v1978 = vmul.f32 %v1968, %v1977
        %v1979 = vmul.f32 %v1969, %v1977
        %v1980 = vmul.f32 %v1970, %v1977
        %v1981 = vmul.f32 %v1971, %v1977
        %v1982 = vmul.f32 %v1972, %v1977
        %v1983 = vmul.f32 %v1973, %v1977
        %v1984 = vmul.f32 %v1974, %v1977
        %v1985 = vmul.f32 %v1975, %v1977
        %v1986 = vadd.f32 %v1911, %v1978
        %v1987 = vadd.f32 %v1912, %v1979
        %v1988 = vadd.f32 %v1913, %v1980
        %v1989 = vadd.f32 %v1914, %v1981
        %v1990 = vadd.f32 %v1915, %v1982
        %v1991 = vadd.f32 %v1916, %v1983
        %v1992 = vadd.f32 %v1917, %v1984
        %v1993 = vadd.f32 %v1918, %v1985
        %1994 = vrot.lane.b32.xlu0 %v1435, 69
        %v1995 = vpop.permute.xlu0 %1994
        %1996 = vrot.lane.b32.xlu0 %v1436, 69
        %v1997 = vpop.permute.xlu0 %1996
        %1998 = vrot.lane.b32.xlu0 %v1437, 69
        %v1999 = vpop.permute.xlu0 %1998
        %2000 = vrot.lane.b32.xlu0 %v1438, 69
        %v2001 = vpop.permute.xlu0 %2000
        %2002 = vrot.lane.b32.xlu0 %v1439, 69
        %v2003 = vpop.permute.xlu0 %2002
        %2004 = vrot.lane.b32.xlu0 %v1440, 69
        %v2005 = vpop.permute.xlu0 %2004
        %2006 = vrot.lane.b32.xlu0 %v1441, 69
        %v2007 = vpop.permute.xlu0 %2006
        %2008 = vrot.lane.b32.xlu0 %v1442, 69
        %v2009 = vpop.permute.xlu0 %2008
        %2018 = vrot.lane.b32.xlu0 %v1435, 5
        %v2019 = vpop.permute.xlu0 %2018
        %2020 = vrot.lane.b32.xlu0 %v1436, 5
        %v2021 = vpop.permute.xlu0 %2020
        %2022 = vrot.lane.b32.xlu0 %v1437, 5
        %v2023 = vpop.permute.xlu0 %2022
        %2024 = vrot.lane.b32.xlu0 %v1438, 5
        %v2025 = vpop.permute.xlu0 %2024
        %2026 = vrot.lane.b32.xlu0 %v1439, 5
        %v2027 = vpop.permute.xlu0 %2026
        %2028 = vrot.lane.b32.xlu0 %v1440, 5
        %v2029 = vpop.permute.xlu0 %2028
        %2030 = vrot.lane.b32.xlu0 %v1441, 5
        %v2031 = vpop.permute.xlu0 %2030
        %2032 = vrot.lane.b32.xlu0 %v1442, 5
        %v2033 = vpop.permute.xlu0 %2032
        %vm2042 = vcmask 39936
        %v2043 = vsel %vm2042, %v1995, %v2019
        %v2044 = vsel %vm2042, %v1997, %v2021
        %v2045 = vsel %vm2042, %v1999, %v2023
        %v2046 = vsel %vm2042, %v2001, %v2025
        %v2047 = vsel %vm2042, %v2003, %v2027
        %v2048 = vsel %vm2042, %v2005, %v2029
        %v2049 = vsel %vm2042, %v2007, %v2031
        %v2050 = vsel %vm2042, %v2009, %v2033
        %v2051 = vld [vmem:[%s3 + $0x8] sm:$0x1]
        %v2052 = vperm.slane %v2051, 0
        %v2053 = vmul.f32 %v2043, %v2052
        %v2054 = vmul.f32 %v2044, %v2052
        %v2055 = vmul.f32 %v2045, %v2052
        %v2056 = vmul.f32 %v2046, %v2052
        %v2057 = vmul.f32 %v2047, %v2052
        %v2058 = vmul.f32 %v2048, %v2052
        %v2059 = vmul.f32 %v2049, %v2052
        %v2060 = vmul.f32 %v2050, %v2052
        %v2061 = vadd.f32 %v1986, %v2053
        %v2062 = vadd.f32 %v1987, %v2054
        %v2063 = vadd.f32 %v1988, %v2055
        %v2064 = vadd.f32 %v1989, %v2056
        %v2065 = vadd.f32 %v1990, %v2057
        %v2066 = vadd.f32 %v1991, %v2058
        %v2067 = vadd.f32 %v1992, %v2059
        %v2068 = vadd.f32 %v1993, %v2060
        %2069 = vrot.lane.b32.xlu0 %v1435, 70
        %v2070 = vpop.permute.xlu0 %2069
        %2071 = vrot.lane.b32.xlu0 %v1436, 70
        %v2072 = vpop.permute.xlu0 %2071
        %2073 = vrot.lane.b32.xlu0 %v1437, 70
        %v2074 = vpop.permute.xlu0 %2073
        %2075 = vrot.lane.b32.xlu0 %v1438, 70
        %v2076 = vpop.permute.xlu0 %2075
        %2077 = vrot.lane.b32.xlu0 %v1439, 70
        %v2078 = vpop.permute.xlu0 %2077
        %2079 = vrot.lane.b32.xlu0 %v1440, 70
        %v2080 = vpop.permute.xlu0 %2079
        %2081 = vrot.lane.b32.xlu0 %v1441, 70
        %v2082 = vpop.permute.xlu0 %2081
        %2083 = vrot.lane.b32.xlu0 %v1442, 70
        %v2084 = vpop.permute.xlu0 %2083
        %2093 = vrot.lane.b32.xlu0 %v1435, 6
        %v2094 = vpop.permute.xlu0 %2093
        %2095 = vrot.lane.b32.xlu0 %v1436, 6
        %v2096 = vpop.permute.xlu0 %2095
        %2097 = vrot.lane.b32.xlu0 %v1437, 6
        %v2098 = vpop.permute.xlu0 %2097
        %2099 = vrot.lane.b32.xlu0 %v1438, 6
        %v2100 = vpop.permute.xlu0 %2099
        %2101 = vrot.lane.b32.xlu0 %v1439, 6
        %v2102 = vpop.permute.xlu0 %2101
        %2103 = vrot.lane.b32.xlu0 %v1440, 6
        %v2104 = vpop.permute.xlu0 %2103
        %2105 = vrot.lane.b32.xlu0 %v1441, 6
        %v2106 = vpop.permute.xlu0 %2105
        %2107 = vrot.lane.b32.xlu0 %v1442, 6
        %v2108 = vpop.permute.xlu0 %2107
        %vm2117 = vcmask 48128
        %v2118 = vsel %vm2117, %v2070, %v2094
        %v2119 = vsel %vm2117, %v2072, %v2096
        %v2120 = vsel %vm2117, %v2074, %v2098
        %v2121 = vsel %vm2117, %v2076, %v2100
        %v2122 = vsel %vm2117, %v2078, %v2102
        %v2123 = vsel %vm2117, %v2080, %v2104
        %v2124 = vsel %vm2117, %v2082, %v2106
        %v2125 = vsel %vm2117, %v2084, %v2108
        %v2126 = vld [vmem:[%s3 + $0x9] sm:$0x1]
        %v2127 = vperm.slane %v2126, 0
        %v2128 = vmul.f32 %v2118, %v2127
        %v2129 = vmul.f32 %v2119, %v2127
        %v2130 = vmul.f32 %v2120, %v2127
        %v2131 = vmul.f32 %v2121, %v2127
        %v2132 = vmul.f32 %v2122, %v2127
        %v2133 = vmul.f32 %v2123, %v2127
        %v2134 = vmul.f32 %v2124, %v2127
        %v2135 = vmul.f32 %v2125, %v2127
        %v2136 = vadd.f32 %v2061, %v2128
        %v2137 = vadd.f32 %v2062, %v2129
        %v2138 = vadd.f32 %v2063, %v2130
        %v2139 = vadd.f32 %v2064, %v2131
        %v2140 = vadd.f32 %v2065, %v2132
        %v2141 = vadd.f32 %v2066, %v2133
        %v2142 = vadd.f32 %v2067, %v2134
        %v2143 = vadd.f32 %v2068, %v2135
        %2144 = vrot.lane.b32.xlu0 %v1435, 71
        %v2145 = vpop.permute.xlu0 %2144
        %2146 = vrot.lane.b32.xlu0 %v1436, 71
        %v2147 = vpop.permute.xlu0 %2146
        %2148 = vrot.lane.b32.xlu0 %v1437, 71
        %v2149 = vpop.permute.xlu0 %2148
        %2150 = vrot.lane.b32.xlu0 %v1438, 71
        %v2151 = vpop.permute.xlu0 %2150
        %2152 = vrot.lane.b32.xlu0 %v1439, 71
        %v2153 = vpop.permute.xlu0 %2152
        %2154 = vrot.lane.b32.xlu0 %v1440, 71
        %v2155 = vpop.permute.xlu0 %2154
        %2156 = vrot.lane.b32.xlu0 %v1441, 71
        %v2157 = vpop.permute.xlu0 %2156
        %2158 = vrot.lane.b32.xlu0 %v1442, 71
        %v2159 = vpop.permute.xlu0 %2158
        %2168 = vrot.lane.b32.xlu0 %v1435, 7
        %v2169 = vpop.permute.xlu0 %2168
        %2170 = vrot.lane.b32.xlu0 %v1436, 7
        %v2171 = vpop.permute.xlu0 %2170
        %2172 = vrot.lane.b32.xlu0 %v1437, 7
        %v2173 = vpop.permute.xlu0 %2172
        %2174 = vrot.lane.b32.xlu0 %v1438, 7
        %v2175 = vpop.permute.xlu0 %2174
        %2176 = vrot.lane.b32.xlu0 %v1439, 7
        %v2177 = vpop.permute.xlu0 %2176
        %2178 = vrot.lane.b32.xlu0 %v1440, 7
        %v2179 = vpop.permute.xlu0 %2178
        %2180 = vrot.lane.b32.xlu0 %v1441, 7
        %v2181 = vpop.permute.xlu0 %2180
        %2182 = vrot.lane.b32.xlu0 %v1442, 7
        %v2183 = vpop.permute.xlu0 %2182
        %vm2192 = vcmask 56320
        %v2193 = vsel %vm2192, %v2145, %v2169
        %v2194 = vsel %vm2192, %v2147, %v2171
        %v2195 = vsel %vm2192, %v2149, %v2173
        %v2196 = vsel %vm2192, %v2151, %v2175
        %v2197 = vsel %vm2192, %v2153, %v2177
        %v2198 = vsel %vm2192, %v2155, %v2179
        %v2199 = vsel %vm2192, %v2157, %v2181
        %v2200 = vsel %vm2192, %v2159, %v2183
        %v2201 = vld [vmem:[%s3 + $0xa] sm:$0x1]
        %v2202 = vperm.slane %v2201, 0
        %v2203 = vmul.f32 %v2193, %v2202
        %v2204 = vmul.f32 %v2194, %v2202
        %v2205 = vmul.f32 %v2195, %v2202
        %v2206 = vmul.f32 %v2196, %v2202
        %v2207 = vmul.f32 %v2197, %v2202
        %v2208 = vmul.f32 %v2198, %v2202
        %v2209 = vmul.f32 %v2199, %v2202
        %v2210 = vmul.f32 %v2200, %v2202
        %v2211 = vadd.f32 %v2136, %v2203
        %v2212 = vadd.f32 %v2137, %v2204
        %v2213 = vadd.f32 %v2138, %v2205
        %v2214 = vadd.f32 %v2139, %v2206
        %v2215 = vadd.f32 %v2140, %v2207
        %v2216 = vadd.f32 %v2141, %v2208
        %v2217 = vadd.f32 %v2142, %v2209
        %v2218 = vadd.f32 %v2143, %v2210
        %2220 = vrot.lane.b32.xlu0 %v2212, 64
        %v2221 = vpop.permute.xlu0 %2220
        %2224 = vrot.lane.b32.xlu0 %v2214, 64
        %v2225 = vpop.permute.xlu0 %2224
        %2228 = vrot.lane.b32.xlu0 %v2216, 64
        %v2229 = vpop.permute.xlu0 %2228
        %2232 = vrot.lane.b32.xlu0 %v2218, 64
        %v2233 = vpop.permute.xlu0 %2232
        %vm2235 = vcmask 523264
        %v2236 = vsel %vm2235, %v2211, %v2221
        %v2237 = vsel %vm2235, %v2213, %v2225
        %v2238 = vsel %vm2235, %v2215, %v2229
        %v2239 = vsel %vm2235, %v2217, %v2233
        %v2240 = vld [vmem:[%s4] sm:$0xf]
        %v2242 = vperm.slane %v2240, 0
        %v2243 = vperm.slane %v2240, 1
        %v2244 = vperm.slane %v2240, 2
        %v2245 = vperm.slane %v2240, 3
        %v2250 = vadd.f32 %v2236, %v2242
        %v2251 = vadd.f32 %v2237, %v2243
        %v2252 = vadd.f32 %v2238, %v2244
        %v2253 = vadd.f32 %v2239, %v2245
        %2254 = vst [vmem:[%s217] sm:$0xff] %v2250
        %2255 = vst [vmem:[%s217 + $0x8] sm:$0xff] %v2251
        %2256 = vst [vmem:[%s217 + $0x10] sm:$0xff] %v2252
        %2257 = vst [vmem:[%s217 + $0x18] sm:$0xff] %v2253
        %s2258 = sand.u32 %s137, 1
        %s2259 = scalar_lea.sflag [#allocation3], %s2258
        %s2260 = sand.u32 %s137, 1
        %s2261 = smul.addr %s2260, 32
        %s2262 = scalar_lea.vmem [#allocation2], %s2261
        // Predicated region
        $region41: #{tpu_custom_call.1} parent=39 // pred_check
          %p2263 = pneg %p147
        $region42: #{tpu_custom_call.1} parent=39 // pred_check_branch
          %2265 = sbr.rel (%p2263) target = $region44
        $region43: #{tpu_custom_call.1} parent=39 // pred_region
          %2267 = vsyncadd %s2259, 0
          %s2268 = smul.addr %s19, 4
          %s2269 = smul.addr %s2268, 8
          %s2270 = scalar_lea.hbm %s5, %s2269
          %s2272 = sshll.u32 %s2262, 4
          %s2273 = int_to_ptr.vmem [resolvable:$true] %s2272
          %s2274 = sshll.u32 %s2270, 4
          %s2275 = int_to_ptr.hbm [resolvable:$true] %s2274
          %2277 = dma.vmem_to_hbm [thread:$0]  %s2273, 512, %s2275, %s2259
        $region44: #{tpu_custom_call.1} parent=39 // pred_fallthru
          _
      $region40: #{tpu_custom_call.1} parent=5 // pred_fallthru
        _
      %p2278 = scmp.le.s32.totalorder 2, %s14
      // Predicated region
      $region45: #{tpu_custom_call.1} parent=5 // pred_check
        %p2279 = pneg %p2278
      $region46: #{tpu_custom_call.1} parent=5 // pred_check_branch
        %2281 = sbr.rel (%p2279) target = $region48
      $region47: #{tpu_custom_call.1} parent=5 // pred_region
        %s2282 = ssub.s32 %s14, 2
        // Predicated region
        $region49: #{tpu_custom_call.1} parent=47 // pred_check
          %p2283 = pneg %p153
        $region50: #{tpu_custom_call.1} parent=47 // pred_check_branch
          %2285 = sbr.rel (%p2283) target = $region52
        $region51: #{tpu_custom_call.1} parent=47 // pred_region
          %s2286 = sand.u32 %s138, 1
          %s2287 = scalar_lea.sflag [#allocation3], %s2286
          %s2288 = sand.u32 %s138, 1
          %s2289 = smul.addr %s2288, 32
          %s2290 = scalar_lea.vmem [#allocation2], %s2289
          %2292 = dma.done %s2287, 512
        $region52: #{tpu_custom_call.1} parent=47 // pred_fallthru
          _
      $region48: #{tpu_custom_call.1} parent=5 // pred_fallthru
        _
    $region6: #{tpu_custom_call.1} parent=1 // loop_footer
      %s18 = sadd.s32 1, %s14
    $region7: #{tpu_custom_call.1} parent=1 // loop_footer_branch
      %13 = sbr.rel target = $region3
    $region8: #{tpu_custom_call.1} parent=1 // loop_exit
      _
    %2293 = vsyncpa [#allocation3], 1
    %s2294 = scalar_lea.sflag [#allocation3], 1
    %2295 = vsyncpa %s2294, 1

</llo_original>
